<compile_context>
chip_gen: v7x
topology: tpu7x:2x2x1
jax: 0.10.0
libtpu: 0.0.40
codegen_flags: <defaults>
</compile_context>

<pallas_src>
import functools

import jax
import jax.numpy as jnp
import numpy as np
from jax import lax
from jax.experimental import pallas as pl
from jax.experimental.pallas import tpu as pltpu


def _round_up(x, m):
    return ((x + m - 1) // m) * m


def _act_footprint(tile_e, d, n_groups, in_itemsize, out_itemsize):
    """VMEM bytes for one grid step: double-buffered blocks + f32 temporaries."""
    blocks = 2 * (n_groups + 1) * tile_e * d * in_itemsize     # input block (G+1, t, d)
    blocks += 2 * n_groups * tile_e * out_itemsize              # output block (G, t)
    interm = (2 + 2 * n_groups) * tile_e * d * 4                # f32 src / dst_all / edge (+slack)
    return blocks + interm


def _pick_tile_e(num_edge, d, n_groups, in_itemsize, out_itemsize, tile_e_max,
                 act_budget=36 * 2**20):
    """Largest 128-multiple tile that fits the VMEM budget and keeps >= 2 tiles."""
    tile_e_max = max(128, (tile_e_max // 128) * 128)
    e128 = _round_up(max(num_edge, 1), 128)
    if num_edge > 128:
        # keep >= 2 grid steps so "parallel" sharding can use both TCs (v7x)
        cap = min(tile_e_max, e128, _round_up(pl.cdiv(num_edge, 2), 128))
    else:
        cap = 128
    tile_e = 128
    t = 256
    while t <= cap:
        if _act_footprint(t, d, n_groups, in_itemsize, out_itemsize) <= act_budget:
            tile_e = t
        t += 128
    return tile_e


def _edge_predictor_kernel(h_ref, wsrc_ref, wdst_ref, bias_ref, wout_ref,
                           bout_ref, out_ref):
    """One grid step: one tile of `tile_e` edges, all (1 + neg_samples) dst groups.

    h_ref    : (G+1, tile_e, d)  group 0 = source rows, groups 1.. = destinations
    wsrc_ref : (d, d)            src_fc weight, stored [in, out]
    wdst_ref : (d, d)            dst_fc weight, stored [in, out]
    bias_ref : (1, d)   f32      b_src + b_dst (folded in the wrapper)
    wout_ref : (1, d)   f32      out_fc weight as a row
    bout_ref : (1, 1)   f32      out_fc bias
    out_ref  : (G, tile_e)       per-group logits, lane-dense
    """
    n_groups, tile_e = out_ref.shape
    d = h_ref.shape[-1]

    # Shared source projection (torch's .tile never re-reads h_src from HBM).
    src = jnp.dot(h_ref[0], wsrc_ref[...], preferred_element_type=jnp.float32)
    src = src + bias_ref[...]                                   # (tile_e, d) f32

    # All destination groups in ONE MXU call (M = G * tile_e).
    dst_in = h_ref[pl.ds(1, n_groups), :, :]                    # (G, tile_e, d)
    dst_all = jnp.dot(dst_in.reshape(n_groups * tile_e, d), wdst_ref[...],
                      preferred_element_type=jnp.float32)       # (G*tile_e, d) f32

    w_out = wout_ref[...]                                       # (1, d) f32
    b_out = bout_ref[...]                                       # (1, 1) f32

    rows = []
    for g in range(n_groups):                                   # G small: static unroll
        edge_g = jnp.maximum(src + dst_all[g * tile_e:(g + 1) * tile_e], 0.0)
        # Linear(d, 1) as an MXU contraction -> lane-dense (1, tile_e) row.
        # (MXU has slack: the kernel is HBM-bound; keeps VPU/XLU free.)
        row_g = lax.dot_general(w_out, edge_g,
                                dimension_numbers=(((1,), (1,)), ((), ())),
                                preferred_element_type=jnp.float32)
        rows.append(row_g + b_out)

    # Single full-block store instead of G masked single-row stores.
    out_ref[...] = jnp.concatenate(rows, axis=0).astype(out_ref.dtype)


def edge_predictor_forward(h, params, neg_samples=1, tile_e=None, tile_e_max=2048):
    """Returns (pos_logits [E, 1], neg_logits [E*neg_samples, 1]).

    bf16 inputs/params are recommended on ALL TPU generations (v5e included):
    the kernel is HBM-bound so halving the bytes ~doubles throughput; all
    accumulation and elementwise math stays in f32 inside the kernel.
    """
    n, d = h.shape
    n_groups = neg_samples + 1            # group 0 = positive, 1.. = negatives
    num_edge = n // (neg_samples + 2)
    total = num_edge * (neg_samples + 2)

    in_itemsize = jnp.dtype(h.dtype).itemsize
    out_dtype = h.dtype
    out_itemsize = jnp.dtype(out_dtype).itemsize

    if tile_e is None:
        tile_e = _pick_tile_e(num_edge, d, n_groups, in_itemsize, out_itemsize,
                              tile_e_max)
    else:
        assert tile_e % 128 == 0, "tile_e must be a multiple of 128"
    e_tiles = max(1, pl.cdiv(num_edge, tile_e))

    # ---- parameters: projection weights stored [in, out]; small vectors in f32. ----
    w_src, w_dst = params["w_src"], params["w_dst"]
    bias = (params["b_src"].astype(jnp.float32)
            + params["b_dst"].astype(jnp.float32)).reshape(1, d)
    w_out_row = params["w_out"].astype(jnp.float32).reshape(1, d)
    b_out = params["b_out"].astype(jnp.float32).reshape(1, 1)

    # ---- activations: contiguous reshape is a pure bitcast -> no HBM copy, no pad. ----
    h_used = h if total == n else h[:total]
    h3 = h_used.reshape(neg_samples + 2, num_edge, d)

    # ---- VMEM budget (double-buffered blocks + resident weights + f32 temps). ----
    act_bytes = _act_footprint(tile_e, d, n_groups, in_itemsize, out_itemsize)
    wgt_bytes = 2 * (2 * d * d * in_itemsize + (2 * d + 1) * 4)
    vmem_limit = int(min(48 * 2**20,                        # < v7x 64 MiB physical
                         max(32 * 2**20, act_bytes + wgt_bytes + 4 * 2**20)))

    full2d = lambda i: (0, 0)

    out = pl.pallas_call(
        _edge_predictor_kernel,
        out_shape=jax.ShapeDtypeStruct((n_groups, num_edge), out_dtype),
        grid_spec=pltpu.PrefetchScalarGridSpec(
            num_scalar_prefetch=0,
            grid=(e_tiles,),
            in_specs=[
                pl.BlockSpec((neg_samples + 2, tile_e, d), lambda i: (0, i, 0)),  # h view
                pl.BlockSpec((d, d), full2d),                                     # W_src
                pl.BlockSpec((d, d), full2d),                                     # W_dst
                pl.BlockSpec((1, d), full2d),                                     # b_src+b_dst
                pl.BlockSpec((1, d), full2d),                                     # w_out row
                pl.BlockSpec((1, 1), full2d),                                     # b_out
            ],
            out_specs=pl.BlockSpec((n_groups, tile_e), lambda i: (0, i)),          # lane-dense
        ),
        compiler_params=pltpu.CompilerParams(
            dimension_semantics=("parallel",),      # edge tiles shard across TCs
            vmem_limit_bytes=vmem_limit),
    )(h3, w_src, w_dst, bias, w_out_row, b_out)

    pos = out[0][:, None]                            # (E, 1)
    neg = out[1:].reshape(-1)[:, None]               # (E * neg_samples, 1)
    return pos, neg


def init_params(key, dim_in, dtype=jnp.float32):
    """Deterministic init mimicking torch.nn.Linear default (U(+/- 1/sqrt(fan_in)))."""
    ks = jax.random.split(key, 6)
    bound = 1.0 / np.sqrt(dim_in)
    u = lambda k, shape: jax.random.uniform(k, shape, dtype, -bound, bound)
    return {
        # weights stored [in, out] (transposed vs torch's [out, in])
        "w_src": u(ks[0], (dim_in, dim_in)),
        "b_src": u(ks[1], (1, dim_in)),
        "w_dst": u(ks[2], (dim_in, dim_in)),
        "b_dst": u(ks[3], (1, dim_in)),
        "w_out": u(ks[4], (1, dim_in)),     # out_fc weight as a row
        "b_out": u(ks[5], (1, 1)),
    }


def _reference_forward(h, params, neg_samples=1):
    """Pure-JAX reference (f32 math, highest matmul precision)."""
    num_edge = h.shape[0] // (neg_samples + 2)
    p = {k: v.astype(jnp.float32) for k, v in params.items()}
    hf = h.astype(jnp.float32)
    with jax.default_matmul_precision("highest"):
        src = hf[:num_edge] @ p["w_src"] + p["b_src"]
        pos_dst = hf[num_edge:2 * num_edge] @ p["w_dst"] + p["b_dst"]
        neg_dst = hf[2 * num_edge:] @ p["w_dst"] + p["b_dst"]
        pos_edge = jax.nn.relu(src + pos_dst)
        neg_edge = jax.nn.relu(jnp.tile(src, (neg_samples, 1)) + neg_dst)
        w_out_col = p["w_out"].reshape(-1, 1)
        pos = pos_edge @ w_out_col + p["b_out"]
        neg = neg_edge @ w_out_col + p["b_out"]
    return pos, neg


if __name__ == "__main__":
    dim_in = 128
    num_edge = 300            # not a multiple of the tile -> exercises the ragged tail
    neg_samples = 2
    n_rows = num_edge * (neg_samples + 2)     # 1200

    key = jax.random.PRNGKey(0)
    k_h, k_p = jax.random.split(key)
    h = jax.random.normal(k_h, (n_rows, dim_in), dtype=jnp.float32)
    params = init_params(k_p, dim_in)

    fwd = jax.jit(functools.partial(edge_predictor_forward, neg_samples=neg_samples))

    # ---- float32 run ----
    pos, neg = fwd(h, params)
    jax.block_until_ready((pos, neg))
    ref_pos, ref_neg = _reference_forward(h, params, neg_samples)
    np.testing.assert_allclose(np.asarray(pos), np.asarray(ref_pos), rtol=5e-3, atol=5e-3)
    np.testing.assert_allclose(np.asarray(neg), np.asarray(ref_neg), rtol=5e-3, atol=5e-3)
    assert pos.shape == (num_edge, 1)
    assert neg.shape == (num_edge * neg_samples, 1)

    # ---- bfloat16 run (recommended on v5e / v6e / v7x; f32 accumulation in-kernel) ----
    h_bf = h.astype(jnp.bfloat16)
    params_bf = {k: v.astype(jnp.bfloat16) for k, v in params.items()}
    pos_bf, neg_bf = fwd(h_bf, params_bf)
    jax.block_until_ready((pos_bf, neg_bf))
    ref_pos_bf, ref_neg_bf = _reference_forward(h_bf, params_bf, neg_samples)
    np.testing.assert_allclose(np.asarray(pos_bf).astype(np.float32),
                               np.asarray(ref_pos_bf), rtol=5e-2, atol=5e-2)
    np.testing.assert_allclose(np.asarray(neg_bf).astype(np.float32),
                               np.asarray(ref_neg_bf), rtol=5e-2, atol=5e-2)

    print("KERNEL_OK")
</pallas_src>

<mosaic_0001>
module attributes {stable_mosaic.version = 11 : i64} {
  func.func @_edge_predictor_kernel(%arg0: i32, %arg1: memref<4x256x128xf32, #tpu.memory_space<vmem>>, %arg2: memref<128x128xf32, #tpu.memory_space<vmem>>, %arg3: memref<128x128xf32, #tpu.memory_space<vmem>>, %arg4: memref<1x128xf32, #tpu.memory_space<vmem>>, %arg5: memref<1x128xf32, #tpu.memory_space<vmem>>, %arg6: memref<1x1xf32, #tpu.memory_space<vmem>>, %arg7: memref<3x256xf32, #tpu.memory_space<vmem>>) attributes {dimension_semantics = [#tpu.dimension_semantics<parallel>], iteration_bounds = array<i64: 2>, scalar_prefetch = 0 : i64, scratch_operands = 0 : i64, tpu.core_type = #tpu.core_type<tc>, window_params = [{transform_indices = @transform_0, window_bounds = array<i64: 4, 256, 128>}, {pipeline_mode = #tpu.pipeline_mode<synchronous>, transform_indices = @transform_1, window_bounds = array<i64: 128, 128>}, {pipeline_mode = #tpu.pipeline_mode<synchronous>, transform_indices = @transform_2, window_bounds = array<i64: 128, 128>}, {pipeline_mode = #tpu.pipeline_mode<synchronous>, transform_indices = @transform_3, window_bounds = array<i64: 1, 128>}, {pipeline_mode = #tpu.pipeline_mode<synchronous>, transform_indices = @transform_4, window_bounds = array<i64: 1, 128>}, {pipeline_mode = #tpu.pipeline_mode<synchronous>, transform_indices = @transform_5, window_bounds = array<i64: 1, 1>}, {transform_indices = @transform_6, window_bounds = array<i64: 3, 256>}]} {
    %c0 = arith.constant 0 : index
    %c0_0 = arith.constant 0 : index
    %c0_1 = arith.constant 0 : index
    %0 = vector.load %arg1[%c0, %c0_0, %c0_1] : memref<4x256x128xf32, #tpu.memory_space<vmem>>, vector<1x256x128xf32>
    %1 = vector.shape_cast %0 : vector<1x256x128xf32> to vector<256x128xf32>
    %c0_2 = arith.constant 0 : index
    %c0_3 = arith.constant 0 : index
    %2 = vector.load %arg2[%c0_2, %c0_3] : memref<128x128xf32, #tpu.memory_space<vmem>>, vector<128x128xf32>
    %cst = arith.constant dense<0.000000e+00> : vector<256x128xf32>
    %3 = tpu.matmul %1, %2, %cst {dimension_numbers = #tpu.dot_dimension_numbers<[1], [0], [0], [1], [0, 0, 1, 1], [], []>} : vector<256x128xf32>, vector<128x128xf32>, vector<256x128xf32> -> vector<256x128xf32>
    %c0_4 = arith.constant 0 : index
    %c0_5 = arith.constant 0 : index
    %4 = vector.load %arg4[%c0_4, %c0_5] : memref<1x128xf32, #tpu.memory_space<vmem>>, vector<1x128xf32>
    %5 = vector.broadcast %4 : vector<1x128xf32> to vector<256x128xf32>
    %6 = arith.addf %3, %5 : vector<256x128xf32>
    %c1 = arith.constant 1 : index
    %c0_6 = arith.constant 0 : index
    %c0_7 = arith.constant 0 : index
    %7 = vector.load %arg1[%c1, %c0_6, %c0_7] : memref<4x256x128xf32, #tpu.memory_space<vmem>>, vector<3x256x128xf32>
    %8 = vector.shape_cast %7 : vector<3x256x128xf32> to vector<768x128xf32>
    %c0_8 = arith.constant 0 : index
    %c0_9 = arith.constant 0 : index
    %9 = vector.load %arg3[%c0_8, %c0_9] : memref<128x128xf32, #tpu.memory_space<vmem>>, vector<128x128xf32>
    %cst_10 = arith.constant dense<0.000000e+00> : vector<768x128xf32>
    %10 = tpu.matmul %8, %9, %cst_10 {dimension_numbers = #tpu.dot_dimension_numbers<[1], [0], [0], [1], [0, 0, 1, 1], [], []>} : vector<768x128xf32>, vector<128x128xf32>, vector<768x128xf32> -> vector<768x128xf32>
    %c0_11 = arith.constant 0 : index
    %c0_12 = arith.constant 0 : index
    %11 = vector.load %arg5[%c0_11, %c0_12] : memref<1x128xf32, #tpu.memory_space<vmem>>, vector<1x128xf32>
    %c0_13 = arith.constant 0 : index
    %c0_14 = arith.constant 0 : index
    %12 = vector.load %arg6[%c0_13, %c0_14] : memref<1x1xf32, #tpu.memory_space<vmem>>, vector<1x1xf32>
    %13 = vector.extract_strided_slice %10 {offsets = [0, 0], sizes = [256, 128], strides = [1, 1]} : vector<768x128xf32> to vector<256x128xf32>
    %14 = arith.addf %6, %13 : vector<256x128xf32>
    %cst_15 = arith.constant 0.000000e+00 : f32
    %15 = vector.broadcast %cst_15 : f32 to vector<256x128xf32>
    %16 = arith.maximumf %14, %15 : vector<256x128xf32>
    %cst_16 = arith.constant dense<0.000000e+00> : vector<1x256xf32>
    %17 = tpu.matmul %11, %16, %cst_16 {dimension_numbers = #tpu.dot_dimension_numbers<[1], [1], [0], [0], [0, 0, 1, 0], [], []>} : vector<1x128xf32>, vector<256x128xf32>, vector<1x256xf32> -> vector<1x256xf32>
    %18 = vector.broadcast %12 : vector<1x1xf32> to vector<1x256xf32>
    %19 = arith.addf %17, %18 : vector<1x256xf32>
    %20 = vector.extract_strided_slice %10 {offsets = [256, 0], sizes = [256, 128], strides = [1, 1]} : vector<768x128xf32> to vector<256x128xf32>
    %21 = arith.addf %6, %20 : vector<256x128xf32>
    %cst_17 = arith.constant 0.000000e+00 : f32
    %22 = vector.broadcast %cst_17 : f32 to vector<256x128xf32>
    %23 = arith.maximumf %21, %22 : vector<256x128xf32>
    %cst_18 = arith.constant dense<0.000000e+00> : vector<1x256xf32>
    %24 = tpu.matmul %11, %23, %cst_18 {dimension_numbers = #tpu.dot_dimension_numbers<[1], [1], [0], [0], [0, 0, 1, 0], [], []>} : vector<1x128xf32>, vector<256x128xf32>, vector<1x256xf32> -> vector<1x256xf32>
    %25 = vector.broadcast %12 : vector<1x1xf32> to vector<1x256xf32>
    %26 = arith.addf %24, %25 : vector<1x256xf32>
    %27 = vector.extract_strided_slice %10 {offsets = [512, 0], sizes = [256, 128], strides = [1, 1]} : vector<768x128xf32> to vector<256x128xf32>
    %28 = arith.addf %6, %27 : vector<256x128xf32>
    %cst_19 = arith.constant 0.000000e+00 : f32
    %29 = vector.broadcast %cst_19 : f32 to vector<256x128xf32>
    %30 = arith.maximumf %28, %29 : vector<256x128xf32>
    %cst_20 = arith.constant dense<0.000000e+00> : vector<1x256xf32>
    %31 = tpu.matmul %11, %30, %cst_20 {dimension_numbers = #tpu.dot_dimension_numbers<[1], [1], [0], [0], [0, 0, 1, 0], [], []>} : vector<1x128xf32>, vector<256x128xf32>, vector<1x256xf32> -> vector<1x256xf32>
    %32 = vector.broadcast %12 : vector<1x1xf32> to vector<1x256xf32>
    %33 = arith.addf %31, %32 : vector<1x256xf32>
    %34 = tpu.concatenate %19, %26, %33 in 0 : vector<1x256xf32>, vector<1x256xf32>, vector<1x256xf32> -> vector<3x256xf32>
    %c0_21 = arith.constant 0 : index
    %c0_22 = arith.constant 0 : index
    %35 = vector.load %arg7[%c0_21, %c0_22] : memref<3x256xf32, #tpu.memory_space<vmem>>, vector<3x256xf32>
    tpu.vector_store %arg7[%c0_21, %c0_22], %34 {strides = array<i32>} : memref<3x256xf32, #tpu.memory_space<vmem>>, vector<3x256xf32>,
    return
  }
  func.func @transform_0(%arg0: i32) -> (i32, i32, i32) {
    %c0_i32 = arith.constant 0 : i32
    %c0_i32_0 = arith.constant 0 : i32
    %c0_i32_1 = arith.constant 0 : i32
    return %c0_i32, %arg0, %c0_i32_0 : i32, i32, i32
  }
  func.func @transform_1(%arg0: i32) -> (i32, i32) {
    %c0_i32 = arith.constant 0 : i32
    %c0_i32_0 = arith.constant 0 : i32
    %c0_i32_1 = arith.constant 0 : i32
    return %c0_i32, %c0_i32_0 : i32, i32
  }
  func.func @transform_2(%arg0: i32) -> (i32, i32) {
    %c0_i32 = arith.constant 0 : i32
    %c0_i32_0 = arith.constant 0 : i32
    %c0_i32_1 = arith.constant 0 : i32
    return %c0_i32, %c0_i32_0 : i32, i32
  }
  func.func @transform_3(%arg0: i32) -> (i32, i32) {
    %c0_i32 = arith.constant 0 : i32
    %c0_i32_0 = arith.constant 0 : i32
    %c0_i32_1 = arith.constant 0 : i32
    return %c0_i32, %c0_i32_0 : i32, i32
  }
  func.func @transform_4(%arg0: i32) -> (i32, i32) {
    %c0_i32 = arith.constant 0 : i32
    %c0_i32_0 = arith.constant 0 : i32
    %c0_i32_1 = arith.constant 0 : i32
    return %c0_i32, %c0_i32_0 : i32, i32
  }
  func.func @transform_5(%arg0: i32) -> (i32, i32) {
    %c0_i32 = arith.constant 0 : i32
    %c0_i32_0 = arith.constant 0 : i32
    %c0_i32_1 = arith.constant 0 : i32
    return %c0_i32, %c0_i32_0 : i32, i32
  }
  func.func @transform_6(%arg0: i32) -> (i32, i32) {
    %c0_i32 = arith.constant 0 : i32
    %c0_i32_0 = arith.constant 0 : i32
    return %c0_i32, %arg0 : i32, i32
  }
}

</mosaic_0001>

<llo_original>
// kernel: edge_predictor_forward.1
$region0: #{edge_predictor_forward.1}
  #allocation0 [shape = 'u32[]', space=smem, size = 0x4, offset = 0x4, fixed_abs, tag = 'smem constant byte address 0x4 - core index']
  #allocation1 [shape = 'u32[144,128]{1,0:T(1,128)}', space=vmem, size = 0x12000, scoped, tag = 'internal scratch']
  #allocation2 [shape = 'f32[1,1]{1,0:T(1,128)S(1)}', space=vmem, size = 0x200, scoped, tag = 'scoped memory for edge_predictor_forward.1']
  %s0 = inlined_call_operand.vmem [shape: f32[4,300,128], index: 0, kind: input, shape index: {}]
  %s1 = inlined_call_operand.vmem [shape: f32[128,128], index: 1, kind: input, shape index: {}]
  %s2 = inlined_call_operand.vmem [shape: f32[128,128], index: 2, kind: input, shape index: {}]
  %s3 = inlined_call_operand.vmem [shape: f32[1,128], index: 3, kind: input, shape index: {}]
  %s4 = inlined_call_operand.vmem [shape: f32[1,128], index: 4, kind: input, shape index: {}]
  %s5 = inlined_call_operand.<no memory space> [shape: f32[1,1], index: 5, kind: input, shape index: {}]
  %s6 = inlined_call_operand.vmem [shape: f32[3,300], index: 6, kind: output, shape index: {}]
  %s7 = sld [smem:[#allocation0]]
  $region171: #{edge_predictor_forward.1} parent=0
    _
  %s9 = ssub.s32 1, %s7
  %s10 = scalar_select 0, %s9, %s7
  %v11 = vstv %s5
  %12 = vst [vmem:[#allocation2] sm:$0x1] %v11
  $region1: #{edge_predictor_forward.1} parent=0
    #allocation3 [shape = 'u8[1048576]{0}', space=vmem, size = 0x100000, scoped, tag = 'input window, operand 0']
    #allocation4 [shape = 'u8[8192]{0}', space=vmem, size = 0x2000, scoped, tag = 'output window, operand 0']
    loop: start=0, step=1, limit=4
    $region2: #{edge_predictor_forward.1} parent=1 // loop_pre_header
      _
    $region3: #{edge_predictor_forward.1} parent=1 // loop_header
      %s14 = sphi 0, %s18
      %p15 = scmp.ge.s32.totalorder %s14, 4
      %s24 = sphi 0, %s26
      %s27 = sphi 0, %s24
      %s28 = sphi 0, %s27
      %s44 = sphi 0, %s28
      %s48 = sphi 0, %s48
      %s50 = sphi 0, %s48
      %s51 = sphi 0, %s50
      %s65 = sphi 0, %s51
      %s69 = sphi 0, %s69
      %s71 = sphi 0, %s69
      %s72 = sphi 0, %s71
      %s86 = sphi 0, %s72
      %s90 = sphi 0, %s90
      %s92 = sphi 0, %s90
      %s93 = sphi 0, %s92
      %s107 = sphi 0, %s93
      %s111 = sphi 0, %s111
      %s113 = sphi 0, %s111
      %s114 = sphi 0, %s113
      %s128 = sphi 0, %s114
      %s132 = sphi 0, %s132
      %s134 = sphi 0, %s132
      %s135 = sphi 0, %s134
      %s149 = sphi 0, %s135
      %s155 = sphi 0, %s157
      %s158 = sphi 0, %s155
      %s159 = sphi 0, %s158
      %s175 = sphi 0, %s159
    $region4: #{edge_predictor_forward.1} parent=1 // loop_header_branch
      %17 = sbr.rel (%p15) target = $region8
    $region5: #{edge_predictor_forward.1} parent=1 // loop_body
      %s19 = ssub.s32 %s14, 1
      %s20 = ssub.s32 %s14, 2
      %s21 = sadd.s32 %s14, 1
      %s22 = ssub.s32 %s14, %s21
      %p23 = scmp.eq.s32.totalorder %s22, 0
      %s25 = sadd.s32 %s24, 1
      %s26 = scalar_select %p23, %s24, %s25
      %p29 = pneg %p23
      %p30 = scmp.eq.s32.totalorder %s14, 1
      %p31 = por %p29, %p30
      %p32 = scmp.ne.s32.totalorder %s24, %s27
      %p33 = scmp.eq.s32.totalorder %s14, 0
      %p34 = por %p32, %p33
      %p35 = scmp.ne.s32.totalorder %s24, %s27
      %p36 = scmp.eq.s32.totalorder %s19, 1
      %p37 = por %p35, %p36
      %p38 = scmp.ne.s32.totalorder %s27, %s28
      %p39 = scmp.eq.s32.totalorder %s19, 0
      %p40 = por %p38, %p39
      %p41 = scmp.ne.s32.totalorder %s27, %s28
      %p42 = scmp.eq.s32.totalorder %s20, 1
      %p43 = por %p41, %p42
      %p45 = scmp.ne.s32.totalorder %s28, %s44
      %p46 = scmp.eq.s32.totalorder %s20, 0
      %p47 = por %p45, %p46
      %s49 = sadd.s32 %s48, 1
      %p52 = scmp.eq.s32.totalorder %s14, 1
      %p53 = scmp.ne.s32.totalorder %s48, %s50
      %p54 = scmp.eq.s32.totalorder %s14, 0
      %p55 = por %p53, %p54
      %p56 = scmp.ne.s32.totalorder %s48, %s50
      %p57 = scmp.eq.s32.totalorder %s19, 1
      %p58 = por %p56, %p57
      %p59 = scmp.ne.s32.totalorder %s50, %s51
      %p60 = scmp.eq.s32.totalorder %s19, 0
      %p61 = por %p59, %p60
      %p62 = scmp.ne.s32.totalorder %s50, %s51
      %p63 = scmp.eq.s32.totalorder %s20, 1
      %p64 = por %p62, %p63
      %p66 = scmp.ne.s32.totalorder %s51, %s65
      %p67 = scmp.eq.s32.totalorder %s20, 0
      %p68 = por %p66, %p67
      %s70 = sadd.s32 %s69, 1
      %p73 = scmp.eq.s32.totalorder %s14, 1
      %p74 = scmp.ne.s32.totalorder %s69, %s71
      %p75 = scmp.eq.s32.totalorder %s14, 0
      %p76 = por %p74, %p75
      %p77 = scmp.ne.s32.totalorder %s69, %s71
      %p78 = scmp.eq.s32.totalorder %s19, 1
      %p79 = por %p77, %p78
      %p80 = scmp.ne.s32.totalorder %s71, %s72
      %p81 = scmp.eq.s32.totalorder %s19, 0
      %p82 = por %p80, %p81
      %p83 = scmp.ne.s32.totalorder %s71, %s72
      %p84 = scmp.eq.s32.totalorder %s20, 1
      %p85 = por %p83, %p84
      %p87 = scmp.ne.s32.totalorder %s72, %s86
      %p88 = scmp.eq.s32.totalorder %s20, 0
      %p89 = por %p87, %p88
      %s91 = sadd.s32 %s90, 1
      %p94 = scmp.eq.s32.totalorder %s14, 1
      %p95 = scmp.ne.s32.totalorder %s90, %s92
      %p96 = scmp.eq.s32.totalorder %s14, 0
      %p97 = por %p95, %p96
      %p98 = scmp.ne.s32.totalorder %s90, %s92
      %p99 = scmp.eq.s32.totalorder %s19, 1
      %p100 = por %p98, %p99
      %p101 = scmp.ne.s32.totalorder %s92, %s93
      %p102 = scmp.eq.s32.totalorder %s19, 0
      %p103 = por %p101, %p102
      %p104 = scmp.ne.s32.totalorder %s92, %s93
      %p105 = scmp.eq.s32.totalorder %s20, 1
      %p106 = por %p104, %p105
      %p108 = scmp.ne.s32.totalorder %s93, %s107
      %p109 = scmp.eq.s32.totalorder %s20, 0
      %p110 = por %p108, %p109
      %s112 = sadd.s32 %s111, 1
      %p115 = scmp.eq.s32.totalorder %s14, 1
      %p116 = scmp.ne.s32.totalorder %s111, %s113
      %p117 = scmp.eq.s32.totalorder %s14, 0
      %p118 = por %p116, %p117
      %p119 = scmp.ne.s32.totalorder %s111, %s113
      %p120 = scmp.eq.s32.totalorder %s19, 1
      %p121 = por %p119, %p120
      %p122 = scmp.ne.s32.totalorder %s113, %s114
      %p123 = scmp.eq.s32.totalorder %s19, 0
      %p124 = por %p122, %p123
      %p125 = scmp.ne.s32.totalorder %s113, %s114
      %p126 = scmp.eq.s32.totalorder %s20, 1
      %p127 = por %p125, %p126
      %p129 = scmp.ne.s32.totalorder %s114, %s128
      %p130 = scmp.eq.s32.totalorder %s20, 0
      %p131 = por %p129, %p130
      %s133 = sadd.s32 %s132, 1
      %p136 = scmp.eq.s32.totalorder %s14, 1
      %p137 = scmp.ne.s32.totalorder %s132, %s134
      %p138 = scmp.eq.s32.totalorder %s14, 0
      %p139 = por %p137, %p138
      %p140 = scmp.ne.s32.totalorder %s132, %s134
      %p141 = scmp.eq.s32.totalorder %s19, 1
      %p142 = por %p140, %p141
      %p143 = scmp.ne.s32.totalorder %s134, %s135
      %p144 = scmp.eq.s32.totalorder %s19, 0
      %p145 = por %p143, %p144
      %p146 = scmp.ne.s32.totalorder %s134, %s135
      %p147 = scmp.eq.s32.totalorder %s20, 1
      %p148 = por %p146, %p147
      %p150 = scmp.ne.s32.totalorder %s135, %s149
      %p151 = scmp.eq.s32.totalorder %s20, 0
      %p152 = por %p150, %p151
      %s153 = ssub.s32 %s14, %s21
      %p154 = scmp.eq.s32.totalorder %s153, 0
      %s156 = sadd.s32 %s155, 1
      %s157 = scalar_select %p154, %s155, %s156
      %p160 = pneg %p154
      %p161 = scmp.eq.s32.totalorder %s14, 1
      %p162 = por %p160, %p161
      %p163 = scmp.ne.s32.totalorder %s155, %s158
      %p164 = scmp.eq.s32.totalorder %s14, 0
      %p165 = por %p163, %p164
      %p166 = scmp.ne.s32.totalorder %s155, %s158
      %p167 = scmp.eq.s32.totalorder %s19, 1
      %p168 = por %p166, %p167
      %p169 = scmp.ne.s32.totalorder %s158, %s159
      %p170 = scmp.eq.s32.totalorder %s19, 0
      %p171 = por %p169, %p170
      %p172 = scmp.ne.s32.totalorder %s158, %s159
      %p173 = scmp.eq.s32.totalorder %s20, 1
      %p174 = por %p172, %p173
      %p176 = scmp.ne.s32.totalorder %s159, %s175
      %p177 = scmp.eq.s32.totalorder %s20, 0
      %p178 = por %p176, %p177
      %p179 = scmp.le.s32.totalorder 1, %s14
      %p180 = scmp.lt.s32.totalorder %s14, 3
      %p181 = pnand %p179, %p180
      %p182 = pneg %p181
      // Predicated region
      $region9: #{edge_predictor_forward.1} parent=5 // pred_check
        _
      $region10: #{edge_predictor_forward.1} parent=5 // pred_check_branch
        %184 = sbr.rel (%p181) target = $region12
      $region11: #{edge_predictor_forward.1} parent=5 // pred_region
        %s185 = ssub.s32 %s14, 1
        // Predicated region
        $region13: #{edge_predictor_forward.1} parent=11 // pred_check
          %p186 = pneg %p61
        $region14: #{edge_predictor_forward.1} parent=11 // pred_check_branch
          %188 = sbr.rel (%p186) target = $region16
        $region15: #{edge_predictor_forward.1} parent=11 // pred_region
          _
        $region16: #{edge_predictor_forward.1} parent=11 // pred_fallthru
          _
        // Predicated region
        $region17: #{edge_predictor_forward.1} parent=11 // pred_check
          %p189 = pneg %p82
        $region18: #{edge_predictor_forward.1} parent=11 // pred_check_branch
          %191 = sbr.rel (%p189) target = $region20
        $region19: #{edge_predictor_forward.1} parent=11 // pred_region
          _
        $region20: #{edge_predictor_forward.1} parent=11 // pred_fallthru
          _
        // Predicated region
        $region21: #{edge_predictor_forward.1} parent=11 // pred_check
          %p192 = pneg %p103
        $region22: #{edge_predictor_forward.1} parent=11 // pred_check_branch
          %194 = sbr.rel (%p192) target = $region24
        $region23: #{edge_predictor_forward.1} parent=11 // pred_region
          _
        $region24: #{edge_predictor_forward.1} parent=11 // pred_fallthru
          _
        // Predicated region
        $region25: #{edge_predictor_forward.1} parent=11 // pred_check
          %p195 = pneg %p124
        $region26: #{edge_predictor_forward.1} parent=11 // pred_check_branch
          %197 = sbr.rel (%p195) target = $region28
        $region27: #{edge_predictor_forward.1} parent=11 // pred_region
          _
        $region28: #{edge_predictor_forward.1} parent=11 // pred_fallthru
          _
        // Predicated region
        $region29: #{edge_predictor_forward.1} parent=11 // pred_check
          %p198 = pneg %p145
        $region30: #{edge_predictor_forward.1} parent=11 // pred_check_branch
          %200 = sbr.rel (%p198) target = $region32
        $region31: #{edge_predictor_forward.1} parent=11 // pred_region
          _
        $region32: #{edge_predictor_forward.1} parent=11 // pred_fallthru
          _
      $region12: #{edge_predictor_forward.1} parent=5 // pred_fallthru
        _
      %p201 = scmp.lt.s32.totalorder %s14, 2
      // Predicated region
      $region33: #{edge_predictor_forward.1} parent=5 // pred_check
        %p202 = pneg %p201
      $region34: #{edge_predictor_forward.1} parent=5 // pred_check_branch
        %204 = sbr.rel (%p202) target = $region36
      $region35: #{edge_predictor_forward.1} parent=5 // pred_region
        // Predicated region
        $region37: #{edge_predictor_forward.1} parent=35 // pred_check
          %p205 = pneg %p34
        $region38: #{edge_predictor_forward.1} parent=35 // pred_check_branch
          %207 = sbr.rel (%p205) target = $region40
        $region39: #{edge_predictor_forward.1} parent=35 // pred_region
          %s208 = sand.u32 %s24, 1
          %s209 = sand.u32 %s24, 1
          %s210 = smul.addr %s209, 1024
          %s211 = scalar_lea.vmem [#allocation3], %s210
          %s212 = smul.u32 32, %s14
          %s213 = ssub.s32 38, %s212
          %p214 = scmp.lt.s32.totalorder %s213, 32
          %s215 = scalar_select %p214, %s213, 32
          %s216 = smul.u32 512, %s215
          %p217 = scmp.ne.s32.totalorder 0, %s216
          %s218 = smul.addr %s212, 8
          %s219 = scalar_lea.vmem %s0, %s218
          // Predicated region
          $region41: #{edge_predictor_forward.1} parent=39 // pred_check
            %p220 = pneg %p217
          $region42: #{edge_predictor_forward.1} parent=39 // pred_check_branch
            %222 = sbr.rel (%p220) target = $region44
          $region43: #{edge_predictor_forward.1} parent=39 // pred_region
            // Predicated region
            $region45: #{edge_predictor_forward.1} parent=43 // pred_check
              _
            $region46: #{edge_predictor_forward.1} parent=43 // pred_check_branch
              %224 = sbr.rel (0) target = $region48
            $region47: #{edge_predictor_forward.1} parent=43 // pred_region
              // Predicated region
              $region67: #{edge_predictor_forward.1} parent=47 // pred_check
                _
              $region68: #{edge_predictor_forward.1} parent=47 // pred_check_branch
                %405 = sbr.rel (0) target = $region70
              $region69: #{edge_predictor_forward.1} parent=47 // pred_region
                %s406 = sshrl.u32 %s215, 4
                // While loop
                $region71: #{edge_predictor_forward.1} parent=69 // loop_pre_header
                  _
                $region72: #{edge_predictor_forward.1} parent=69 // loop_header
                  %s408 = sphi 0, %s410
                  %p409 = scmp.ge.s32.totalorder %s408, %s406
                  %s413 = sphi 0, %s546
                  %s414 = sphi %s219, %s549
                  %s415 = sphi %s211, %s550
                $region73: #{edge_predictor_forward.1} parent=69 // loop_header_branch
                  %412 = sbr.rel (%p409) target = $region77
                $region74: #{edge_predictor_forward.1} parent=69 // loop_body
                  %v416 = vld [vmem:[%s414] sm:$0xff]
                  %417 = vst [vmem:[%s415] sm:$0xff] %v416
                  %v418 = vld [vmem:[%s414 + $0x8] sm:$0xff]
                  %419 = vst [vmem:[%s415 + $0x8] sm:$0xff] %v418
                  %v420 = vld [vmem:[%s414 + $0x10] sm:$0xff]
                  %421 = vst [vmem:[%s415 + $0x10] sm:$0xff] %v420
                  %v422 = vld [vmem:[%s414 + $0x18] sm:$0xff]
                  %423 = vst [vmem:[%s415 + $0x18] sm:$0xff] %v422
                  %v424 = vld [vmem:[%s414 + $0x20] sm:$0xff]
                  %425 = vst [vmem:[%s415 + $0x20] sm:$0xff] %v424
                  %v426 = vld [vmem:[%s414 + $0x28] sm:$0xff]
                  %427 = vst [vmem:[%s415 + $0x28] sm:$0xff] %v426
                  %v428 = vld [vmem:[%s414 + $0x30] sm:$0xff]
                  %429 = vst [vmem:[%s415 + $0x30] sm:$0xff] %v428
                  %v430 = vld [vmem:[%s414 + $0x38] sm:$0xff]
                  %431 = vst [vmem:[%s415 + $0x38] sm:$0xff] %v430
                  %v432 = vld [vmem:[%s414 + $0x40] sm:$0xff]
                  %433 = vst [vmem:[%s415 + $0x40] sm:$0xff] %v432
                  %v434 = vld [vmem:[%s414 + $0x48] sm:$0xff]
                  %435 = vst [vmem:[%s415 + $0x48] sm:$0xff] %v434
                  %v436 = vld [vmem:[%s414 + $0x50] sm:$0xff]
                  %437 = vst [vmem:[%s415 + $0x50] sm:$0xff] %v436
                  %v438 = vld [vmem:[%s414 + $0x58] sm:$0xff]
                  %439 = vst [vmem:[%s415 + $0x58] sm:$0xff] %v438
                  %v440 = vld [vmem:[%s414 + $0x60] sm:$0xff]
                  %441 = vst [vmem:[%s415 + $0x60] sm:$0xff] %v440
                  %v442 = vld [vmem:[%s414 + $0x68] sm:$0xff]
                  %443 = vst [vmem:[%s415 + $0x68] sm:$0xff] %v442
                  %v444 = vld [vmem:[%s414 + $0x70] sm:$0xff]
                  %445 = vst [vmem:[%s415 + $0x70] sm:$0xff] %v444
                  %v446 = vld [vmem:[%s414 + $0x78] sm:$0xff]
                  %447 = vst [vmem:[%s415 + $0x78] sm:$0xff] %v446
                  %v448 = vld [vmem:[%s414 + $0x130] sm:$0xff]
                  %449 = vst [vmem:[%s415 + $0x100] sm:$0xff] %v448
                  %v450 = vld [vmem:[%s414 + $0x138] sm:$0xff]
                  %451 = vst [vmem:[%s415 + $0x108] sm:$0xff] %v450
                  %v452 = vld [vmem:[%s414 + $0x140] sm:$0xff]
                  %453 = vst [vmem:[%s415 + $0x110] sm:$0xff] %v452
                  %v454 = vld [vmem:[%s414 + $0x148] sm:$0xff]
                  %455 = vst [vmem:[%s415 + $0x118] sm:$0xff] %v454
                  %v456 = vld [vmem:[%s414 + $0x150] sm:$0xff]
                  %457 = vst [vmem:[%s415 + $0x120] sm:$0xff] %v456
                  %v458 = vld [vmem:[%s414 + $0x158] sm:$0xff]
                  %459 = vst [vmem:[%s415 + $0x128] sm:$0xff] %v458
                  %v460 = vld [vmem:[%s414 + $0x160] sm:$0xff]
                  %461 = vst [vmem:[%s415 + $0x130] sm:$0xff] %v460
                  %v462 = vld [vmem:[%s414 + $0x168] sm:$0xff]
                  %463 = vst [vmem:[%s415 + $0x138] sm:$0xff] %v462
                  %v464 = vld [vmem:[%s414 + $0x170] sm:$0xff]
                  %465 = vst [vmem:[%s415 + $0x140] sm:$0xff] %v464
                  %v466 = vld [vmem:[%s414 + $0x178] sm:$0xff]
                  %467 = vst [vmem:[%s415 + $0x148] sm:$0xff] %v466
                  %v468 = vld [vmem:[%s414 + $0x180] sm:$0xff]
                  %469 = vst [vmem:[%s415 + $0x150] sm:$0xff] %v468
                  %v470 = vld [vmem:[%s414 + $0x188] sm:$0xff]
                  %471 = vst [vmem:[%s415 + $0x158] sm:$0xff] %v470
                  %v472 = vld [vmem:[%s414 + $0x190] sm:$0xff]
                  %473 = vst [vmem:[%s415 + $0x160] sm:$0xff] %v472
                  %v474 = vld [vmem:[%s414 + $0x198] sm:$0xff]
                  %475 = vst [vmem:[%s415 + $0x168] sm:$0xff] %v474
                  %v476 = vld [vmem:[%s414 + $0x1a0] sm:$0xff]
                  %477 = vst [vmem:[%s415 + $0x170] sm:$0xff] %v476
                  %v478 = vld [vmem:[%s414 + $0x1a8] sm:$0xff]
                  %479 = vst [vmem:[%s415 + $0x178] sm:$0xff] %v478
                  %v480 = vld [vmem:[%s414 + $0x260] sm:$0xff]
                  %481 = vst [vmem:[%s415 + $0x200] sm:$0xff] %v480
                  %v482 = vld [vmem:[%s414 + $0x268] sm:$0xff]
                  %483 = vst [vmem:[%s415 + $0x208] sm:$0xff] %v482
                  %v484 = vld [vmem:[%s414 + $0x270] sm:$0xff]
                  %485 = vst [vmem:[%s415 + $0x210] sm:$0xff] %v484
                  %v486 = vld [vmem:[%s414 + $0x278] sm:$0xff]
                  %487 = vst [vmem:[%s415 + $0x218] sm:$0xff] %v486
                  %v488 = vld [vmem:[%s414 + $0x280] sm:$0xff]
                  %489 = vst [vmem:[%s415 + $0x220] sm:$0xff] %v488
                  %v490 = vld [vmem:[%s414 + $0x288] sm:$0xff]
                  %491 = vst [vmem:[%s415 + $0x228] sm:$0xff] %v490
                  %v492 = vld [vmem:[%s414 + $0x290] sm:$0xff]
                  %493 = vst [vmem:[%s415 + $0x230] sm:$0xff] %v492
                  %v494 = vld [vmem:[%s414 + $0x298] sm:$0xff]
                  %495 = vst [vmem:[%s415 + $0x238] sm:$0xff] %v494
                  %v496 = vld [vmem:[%s414 + $0x2a0] sm:$0xff]
                  %497 = vst [vmem:[%s415 + $0x240] sm:$0xff] %v496
                  %v498 = vld [vmem:[%s414 + $0x2a8] sm:$0xff]
                  %499 = vst [vmem:[%s415 + $0x248] sm:$0xff] %v498
                  %v500 = vld [vmem:[%s414 + $0x2b0] sm:$0xff]
                  %501 = vst [vmem:[%s415 + $0x250] sm:$0xff] %v500
                  %v502 = vld [vmem:[%s414 + $0x2b8] sm:$0xff]
                  %503 = vst [vmem:[%s415 + $0x258] sm:$0xff] %v502
                  %v504 = vld [vmem:[%s414 + $0x2c0] sm:$0xff]
                  %505 = vst [vmem:[%s415 + $0x260] sm:$0xff] %v504
                  %v506 = vld [vmem:[%s414 + $0x2c8] sm:$0xff]
                  %507 = vst [vmem:[%s415 + $0x268] sm:$0xff] %v506
                  %v508 = vld [vmem:[%s414 + $0x2d0] sm:$0xff]
                  %509 = vst [vmem:[%s415 + $0x270] sm:$0xff] %v508
                  %v510 = vld [vmem:[%s414 + $0x2d8] sm:$0xff]
                  %511 = vst [vmem:[%s415 + $0x278] sm:$0xff] %v510
                  %v512 = vld [vmem:[%s414 + $0x390] sm:$0xff]
                  %513 = vst [vmem:[%s415 + $0x300] sm:$0xff] %v512
                  %v514 = vld [vmem:[%s414 + $0x398] sm:$0xff]
                  %515 = vst [vmem:[%s415 + $0x308] sm:$0xff] %v514
                  %v516 = vld [vmem:[%s414 + $0x3a0] sm:$0xff]
                  %517 = vst [vmem:[%s415 + $0x310] sm:$0xff] %v516
                  %v518 = vld [vmem:[%s414 + $0x3a8] sm:$0xff]
                  %519 = vst [vmem:[%s415 + $0x318] sm:$0xff] %v518
                  %v520 = vld [vmem:[%s414 + $0x3b0] sm:$0xff]
                  %521 = vst [vmem:[%s415 + $0x320] sm:$0xff] %v520
                  %v522 = vld [vmem:[%s414 + $0x3b8] sm:$0xff]
                  %523 = vst [vmem:[%s415 + $0x328] sm:$0xff] %v522
                  %v524 = vld [vmem:[%s414 + $0x3c0] sm:$0xff]
                  %525 = vst [vmem:[%s415 + $0x330] sm:$0xff] %v524
                  %v526 = vld [vmem:[%s414 + $0x3c8] sm:$0xff]
                  %527 = vst [vmem:[%s415 + $0x338] sm:$0xff] %v526
                  %v528 = vld [vmem:[%s414 + $0x3d0] sm:$0xff]
                  %529 = vst [vmem:[%s415 + $0x340] sm:$0xff] %v528
                  %v530 = vld [vmem:[%s414 + $0x3d8] sm:$0xff]
                  %531 = vst [vmem:[%s415 + $0x348] sm:$0xff] %v530
                  %v532 = vld [vmem:[%s414 + $0x3e0] sm:$0xff]
                  %533 = vst [vmem:[%s415 + $0x350] sm:$0xff] %v532
                  %v534 = vld [vmem:[%s414 + $0x3e8] sm:$0xff]
                  %535 = vst [vmem:[%s415 + $0x358] sm:$0xff] %v534
                  %v536 = vld [vmem:[%s414 + $0x3f0] sm:$0xff]
                  %537 = vst [vmem:[%s415 + $0x360] sm:$0xff] %v536
                  %v538 = vld [vmem:[%s414 + $0x3f8] sm:$0xff]
                  %539 = vst [vmem:[%s415 + $0x368] sm:$0xff] %v538
                  %v540 = vld [vmem:[%s414 + $0x400] sm:$0xff]
                  %541 = vst [vmem:[%s415 + $0x370] sm:$0xff] %v540
                  %v542 = vld [vmem:[%s414 + $0x408] sm:$0xff]
                  %543 = vst [vmem:[%s415 + $0x378] sm:$0xff] %v542
                  %s544 = sadd.s32 1, %s413
                  %p545 = scmp.ge.s32.totalorder %s544, %s406
                  %s546 = scalar_select %p545, 0, %s544
                  %s547 = smul.u32 %s546, 128
                  %s548 = smul.u32 %s546, 128
                  %s549 = scalar_lea.vmem %s219, %s547
                  %s550 = scalar_lea.vmem %s211, %s548 [#allocation3]
                $region75: #{edge_predictor_forward.1} parent=69 // loop_footer
                  %s410 = sadd.s32 %s408, 1
                $region76: #{edge_predictor_forward.1} parent=69 // loop_footer_branch
                  %407 = sbr.rel target = $region72
                $region77: #{edge_predictor_forward.1} parent=69 // loop_exit
                  _
                %s551 = sshrl.u32 %s215, 4
                %s552 = sand.u32 %s215, 15
                %s553 = smul.u32 %s551, 16
                %s554 = smul.u32 8, %s553
                %s555 = scalar_lea.vmem %s219, %s554
                %s556 = smul.u32 8, %s553
                %s557 = scalar_lea.vmem %s211, %s556 [#allocation3]
                // While loop
                $region78: #{edge_predictor_forward.1} parent=69 // loop_pre_header
                  _
                $region79: #{edge_predictor_forward.1} parent=69 // loop_header
                  %s559 = sphi 0, %s561
                  %p560 = scmp.ge.s32.totalorder %s559, %s552
                  %s564 = sphi 0, %s577
                  %s565 = sphi %s555, %s580
                  %s566 = sphi %s557, %s581
                $region80: #{edge_predictor_forward.1} parent=69 // loop_header_branch
                  %563 = sbr.rel (%p560) target = $region84
                $region81: #{edge_predictor_forward.1} parent=69 // loop_body
                  %v567 = vld [vmem:[%s565] sm:$0xff]
                  %568 = vst [vmem:[%s566] sm:$0xff] %v567
                  %v569 = vld [vmem:[%s565 + $0x130] sm:$0xff]
                  %570 = vst [vmem:[%s566 + $0x100] sm:$0xff] %v569
                  %v571 = vld [vmem:[%s565 + $0x260] sm:$0xff]
                  %572 = vst [vmem:[%s566 + $0x200] sm:$0xff] %v571
                  %v573 = vld [vmem:[%s565 + $0x390] sm:$0xff]
                  %574 = vst [vmem:[%s566 + $0x300] sm:$0xff] %v573
                  %s575 = sadd.s32 1, %s564
                  %p576 = scmp.ge.s32.totalorder %s575, %s552
                  %s577 = scalar_select %p576, 0, %s575
                  %s578 = smul.u32 %s577, 8
                  %s579 = smul.u32 %s577, 8
                  %s580 = scalar_lea.vmem %s555, %s578
                  %s581 = scalar_lea.vmem %s557, %s579 [#allocation3]
                $region82: #{edge_predictor_forward.1} parent=69 // loop_footer
                  %s561 = sadd.s32 %s559, 1
                $region83: #{edge_predictor_forward.1} parent=69 // loop_footer_branch
                  %558 = sbr.rel target = $region79
                $region84: #{edge_predictor_forward.1} parent=69 // loop_exit
                  _
              $region70: #{edge_predictor_forward.1} parent=47 // pred_fallthru
                _
              // Predicated region
              $region85: #{edge_predictor_forward.1} parent=47 // pred_check
                _
              $region86: #{edge_predictor_forward.1} parent=47 // pred_check_branch
                %583 = sbr.rel target = $region88
              $region87: #{edge_predictor_forward.1} parent=47 // pred_region
                _
              $region88: #{edge_predictor_forward.1} parent=47 // pred_fallthru
                _
            $region48: #{edge_predictor_forward.1} parent=43 // pred_fallthru
              _
            // Predicated region
            $region49: #{edge_predictor_forward.1} parent=43 // pred_check
              _
            $region50: #{edge_predictor_forward.1} parent=43 // pred_check_branch
              %226 = sbr.rel target = $region52
            $region51: #{edge_predictor_forward.1} parent=43 // pred_region
              %s228 = sshrl.u32 %s215, 4
              // While loop
              $region53: #{edge_predictor_forward.1} parent=51 // loop_pre_header
                _
              $region54: #{edge_predictor_forward.1} parent=51 // loop_header
                %s230 = sphi 0, %s232
                %p231 = scmp.ge.s32.totalorder %s230, %s228
                %s235 = sphi 0, %s368
                %s236 = sphi %s219, %s371
                %s237 = sphi %s211, %s372
              $region55: #{edge_predictor_forward.1} parent=51 // loop_header_branch
                %234 = sbr.rel (%p231) target = $region59
              $region56: #{edge_predictor_forward.1} parent=51 // loop_body
                %v238 = vld [vmem:[%s236] sm:$0xff]
                %239 = vst [vmem:[%s237] sm:$0xff] %v238
                %v240 = vld [vmem:[%s236 + $0x8] sm:$0xff]
                %241 = vst [vmem:[%s237 + $0x8] sm:$0xff] %v240
                %v242 = vld [vmem:[%s236 + $0x10] sm:$0xff]
                %243 = vst [vmem:[%s237 + $0x10] sm:$0xff] %v242
                %v244 = vld [vmem:[%s236 + $0x18] sm:$0xff]
                %245 = vst [vmem:[%s237 + $0x18] sm:$0xff] %v244
                %v246 = vld [vmem:[%s236 + $0x20] sm:$0xff]
                %247 = vst [vmem:[%s237 + $0x20] sm:$0xff] %v246
                %v248 = vld [vmem:[%s236 + $0x28] sm:$0xff]
                %249 = vst [vmem:[%s237 + $0x28] sm:$0xff] %v248
                %v250 = vld [vmem:[%s236 + $0x30] sm:$0xff]
                %251 = vst [vmem:[%s237 + $0x30] sm:$0xff] %v250
                %v252 = vld [vmem:[%s236 + $0x38] sm:$0xff]
                %253 = vst [vmem:[%s237 + $0x38] sm:$0xff] %v252
                %v254 = vld [vmem:[%s236 + $0x40] sm:$0xff]
                %255 = vst [vmem:[%s237 + $0x40] sm:$0xff] %v254
                %v256 = vld [vmem:[%s236 + $0x48] sm:$0xff]
                %257 = vst [vmem:[%s237 + $0x48] sm:$0xff] %v256
                %v258 = vld [vmem:[%s236 + $0x50] sm:$0xff]
                %259 = vst [vmem:[%s237 + $0x50] sm:$0xff] %v258
                %v260 = vld [vmem:[%s236 + $0x58] sm:$0xff]
                %261 = vst [vmem:[%s237 + $0x58] sm:$0xff] %v260
                %v262 = vld [vmem:[%s236 + $0x60] sm:$0xff]
                %263 = vst [vmem:[%s237 + $0x60] sm:$0xff] %v262
                %v264 = vld [vmem:[%s236 + $0x68] sm:$0xff]
                %265 = vst [vmem:[%s237 + $0x68] sm:$0xff] %v264
                %v266 = vld [vmem:[%s236 + $0x70] sm:$0xff]
                %267 = vst [vmem:[%s237 + $0x70] sm:$0xff] %v266
                %v268 = vld [vmem:[%s236 + $0x78] sm:$0xff]
                %269 = vst [vmem:[%s237 + $0x78] sm:$0xff] %v268
                %v270 = vld [vmem:[%s236 + $0x130] sm:$0xff]
                %271 = vst [vmem:[%s237 + $0x100] sm:$0xff] %v270
                %v272 = vld [vmem:[%s236 + $0x138] sm:$0xff]
                %273 = vst [vmem:[%s237 + $0x108] sm:$0xff] %v272
                %v274 = vld [vmem:[%s236 + $0x140] sm:$0xff]
                %275 = vst [vmem:[%s237 + $0x110] sm:$0xff] %v274
                %v276 = vld [vmem:[%s236 + $0x148] sm:$0xff]
                %277 = vst [vmem:[%s237 + $0x118] sm:$0xff] %v276
                %v278 = vld [vmem:[%s236 + $0x150] sm:$0xff]
                %279 = vst [vmem:[%s237 + $0x120] sm:$0xff] %v278
                %v280 = vld [vmem:[%s236 + $0x158] sm:$0xff]
                %281 = vst [vmem:[%s237 + $0x128] sm:$0xff] %v280
                %v282 = vld [vmem:[%s236 + $0x160] sm:$0xff]
                %283 = vst [vmem:[%s237 + $0x130] sm:$0xff] %v282
                %v284 = vld [vmem:[%s236 + $0x168] sm:$0xff]
                %285 = vst [vmem:[%s237 + $0x138] sm:$0xff] %v284
                %v286 = vld [vmem:[%s236 + $0x170] sm:$0xff]
                %287 = vst [vmem:[%s237 + $0x140] sm:$0xff] %v286
                %v288 = vld [vmem:[%s236 + $0x178] sm:$0xff]
                %289 = vst [vmem:[%s237 + $0x148] sm:$0xff] %v288
                %v290 = vld [vmem:[%s236 + $0x180] sm:$0xff]
                %291 = vst [vmem:[%s237 + $0x150] sm:$0xff] %v290
                %v292 = vld [vmem:[%s236 + $0x188] sm:$0xff]
                %293 = vst [vmem:[%s237 + $0x158] sm:$0xff] %v292
                %v294 = vld [vmem:[%s236 + $0x190] sm:$0xff]
                %295 = vst [vmem:[%s237 + $0x160] sm:$0xff] %v294
                %v296 = vld [vmem:[%s236 + $0x198] sm:$0xff]
                %297 = vst [vmem:[%s237 + $0x168] sm:$0xff] %v296
                %v298 = vld [vmem:[%s236 + $0x1a0] sm:$0xff]
                %299 = vst [vmem:[%s237 + $0x170] sm:$0xff] %v298
                %v300 = vld [vmem:[%s236 + $0x1a8] sm:$0xff]
                %301 = vst [vmem:[%s237 + $0x178] sm:$0xff] %v300
                %v302 = vld [vmem:[%s236 + $0x260] sm:$0xff]
                %303 = vst [vmem:[%s237 + $0x200] sm:$0xff] %v302
                %v304 = vld [vmem:[%s236 + $0x268] sm:$0xff]
                %305 = vst [vmem:[%s237 + $0x208] sm:$0xff] %v304
                %v306 = vld [vmem:[%s236 + $0x270] sm:$0xff]
                %307 = vst [vmem:[%s237 + $0x210] sm:$0xff] %v306
                %v308 = vld [vmem:[%s236 + $0x278] sm:$0xff]
                %309 = vst [vmem:[%s237 + $0x218] sm:$0xff] %v308
                %v310 = vld [vmem:[%s236 + $0x280] sm:$0xff]
                %311 = vst [vmem:[%s237 + $0x220] sm:$0xff] %v310
                %v312 = vld [vmem:[%s236 + $0x288] sm:$0xff]
                %313 = vst [vmem:[%s237 + $0x228] sm:$0xff] %v312
                %v314 = vld [vmem:[%s236 + $0x290] sm:$0xff]
                %315 = vst [vmem:[%s237 + $0x230] sm:$0xff] %v314
                %v316 = vld [vmem:[%s236 + $0x298] sm:$0xff]
                %317 = vst [vmem:[%s237 + $0x238] sm:$0xff] %v316
                %v318 = vld [vmem:[%s236 + $0x2a0] sm:$0xff]
                %319 = vst [vmem:[%s237 + $0x240] sm:$0xff] %v318
                %v320 = vld [vmem:[%s236 + $0x2a8] sm:$0xff]
                %321 = vst [vmem:[%s237 + $0x248] sm:$0xff] %v320
                %v322 = vld [vmem:[%s236 + $0x2b0] sm:$0xff]
                %323 = vst [vmem:[%s237 + $0x250] sm:$0xff] %v322
                %v324 = vld [vmem:[%s236 + $0x2b8] sm:$0xff]
                %325 = vst [vmem:[%s237 + $0x258] sm:$0xff] %v324
                %v326 = vld [vmem:[%s236 + $0x2c0] sm:$0xff]
                %327 = vst [vmem:[%s237 + $0x260] sm:$0xff] %v326
                %v328 = vld [vmem:[%s236 + $0x2c8] sm:$0xff]
                %329 = vst [vmem:[%s237 + $0x268] sm:$0xff] %v328
                %v330 = vld [vmem:[%s236 + $0x2d0] sm:$0xff]
                %331 = vst [vmem:[%s237 + $0x270] sm:$0xff] %v330
                %v332 = vld [vmem:[%s236 + $0x2d8] sm:$0xff]
                %333 = vst [vmem:[%s237 + $0x278] sm:$0xff] %v332
                %v334 = vld [vmem:[%s236 + $0x390] sm:$0xff]
                %335 = vst [vmem:[%s237 + $0x300] sm:$0xff] %v334
                %v336 = vld [vmem:[%s236 + $0x398] sm:$0xff]
                %337 = vst [vmem:[%s237 + $0x308] sm:$0xff] %v336
                %v338 = vld [vmem:[%s236 + $0x3a0] sm:$0xff]
                %339 = vst [vmem:[%s237 + $0x310] sm:$0xff] %v338
                %v340 = vld [vmem:[%s236 + $0x3a8] sm:$0xff]
                %341 = vst [vmem:[%s237 + $0x318] sm:$0xff] %v340
                %v342 = vld [vmem:[%s236 + $0x3b0] sm:$0xff]
                %343 = vst [vmem:[%s237 + $0x320] sm:$0xff] %v342
                %v344 = vld [vmem:[%s236 + $0x3b8] sm:$0xff]
                %345 = vst [vmem:[%s237 + $0x328] sm:$0xff] %v344
                %v346 = vld [vmem:[%s236 + $0x3c0] sm:$0xff]
                %347 = vst [vmem:[%s237 + $0x330] sm:$0xff] %v346
                %v348 = vld [vmem:[%s236 + $0x3c8] sm:$0xff]
                %349 = vst [vmem:[%s237 + $0x338] sm:$0xff] %v348
                %v350 = vld [vmem:[%s236 + $0x3d0] sm:$0xff]
                %351 = vst [vmem:[%s237 + $0x340] sm:$0xff] %v350
                %v352 = vld [vmem:[%s236 + $0x3d8] sm:$0xff]
                %353 = vst [vmem:[%s237 + $0x348] sm:$0xff] %v352
                %v354 = vld [vmem:[%s236 + $0x3e0] sm:$0xff]
                %355 = vst [vmem:[%s237 + $0x350] sm:$0xff] %v354
                %v356 = vld [vmem:[%s236 + $0x3e8] sm:$0xff]
                %357 = vst [vmem:[%s237 + $0x358] sm:$0xff] %v356
                %v358 = vld [vmem:[%s236 + $0x3f0] sm:$0xff]
                %359 = vst [vmem:[%s237 + $0x360] sm:$0xff] %v358
                %v360 = vld [vmem:[%s236 + $0x3f8] sm:$0xff]
                %361 = vst [vmem:[%s237 + $0x368] sm:$0xff] %v360
                %v362 = vld [vmem:[%s236 + $0x400] sm:$0xff]
                %363 = vst [vmem:[%s237 + $0x370] sm:$0xff] %v362
                %v364 = vld [vmem:[%s236 + $0x408] sm:$0xff]
                %365 = vst [vmem:[%s237 + $0x378] sm:$0xff] %v364
                %s366 = sadd.s32 1, %s235
                %p367 = scmp.ge.s32.totalorder %s366, %s228
                %s368 = scalar_select %p367, 0, %s366
                %s369 = smul.u32 %s368, 128
                %s370 = smul.u32 %s368, 128
                %s371 = scalar_lea.vmem %s219, %s369
                %s372 = scalar_lea.vmem %s211, %s370 [#allocation3]
              $region57: #{edge_predictor_forward.1} parent=51 // loop_footer
                %s232 = sadd.s32 %s230, 1
              $region58: #{edge_predictor_forward.1} parent=51 // loop_footer_branch
                %229 = sbr.rel target = $region54
              $region59: #{edge_predictor_forward.1} parent=51 // loop_exit
                _
              %s373 = sshrl.u32 %s215, 4
              %s374 = sand.u32 %s215, 15
              %s375 = smul.u32 %s373, 16
              %s376 = smul.u32 8, %s375
              %s377 = scalar_lea.vmem %s219, %s376
              %s378 = smul.u32 8, %s375
              %s379 = scalar_lea.vmem %s211, %s378 [#allocation3]
              // While loop
              $region60: #{edge_predictor_forward.1} parent=51 // loop_pre_header
                _
              $region61: #{edge_predictor_forward.1} parent=51 // loop_header
                %s381 = sphi 0, %s383
                %p382 = scmp.ge.s32.totalorder %s381, %s374
                %s386 = sphi 0, %s399
                %s387 = sphi %s377, %s402
                %s388 = sphi %s379, %s403
              $region62: #{edge_predictor_forward.1} parent=51 // loop_header_branch
                %385 = sbr.rel (%p382) target = $region66
              $region63: #{edge_predictor_forward.1} parent=51 // loop_body
                %v389 = vld [vmem:[%s387] sm:$0xff]
                %390 = vst [vmem:[%s388] sm:$0xff] %v389
                %v391 = vld [vmem:[%s387 + $0x130] sm:$0xff]
                %392 = vst [vmem:[%s388 + $0x100] sm:$0xff] %v391
                %v393 = vld [vmem:[%s387 + $0x260] sm:$0xff]
                %394 = vst [vmem:[%s388 + $0x200] sm:$0xff] %v393
                %v395 = vld [vmem:[%s387 + $0x390] sm:$0xff]
                %396 = vst [vmem:[%s388 + $0x300] sm:$0xff] %v395
                %s397 = sadd.s32 1, %s386
                %p398 = scmp.ge.s32.totalorder %s397, %s374
                %s399 = scalar_select %p398, 0, %s397
                %s400 = smul.u32 %s399, 8
                %s401 = smul.u32 %s399, 8
                %s402 = scalar_lea.vmem %s377, %s400
                %s403 = scalar_lea.vmem %s379, %s401 [#allocation3]
              $region64: #{edge_predictor_forward.1} parent=51 // loop_footer
                %s383 = sadd.s32 %s381, 1
              $region65: #{edge_predictor_forward.1} parent=51 // loop_footer_branch
                %380 = sbr.rel target = $region61
              $region66: #{edge_predictor_forward.1} parent=51 // loop_exit
                _
            $region52: #{edge_predictor_forward.1} parent=43 // pred_fallthru
              _
          $region44: #{edge_predictor_forward.1} parent=39 // pred_fallthru
            _
          %584 = vnop
        $region40: #{edge_predictor_forward.1} parent=35 // pred_fallthru
          _
      $region36: #{edge_predictor_forward.1} parent=5 // pred_fallthru
        _
      %p585 = scmp.le.s32.totalorder 1, %s14
      %p586 = scmp.lt.s32.totalorder %s14, 3
      %p587 = pnand %p585, %p586
      %p588 = pneg %p587
      // Predicated region
      $region89: #{edge_predictor_forward.1} parent=5 // pred_check
        _
      $region90: #{edge_predictor_forward.1} parent=5 // pred_check_branch
        %590 = sbr.rel (%p587) target = $region92
      $region91: #{edge_predictor_forward.1} parent=5 // pred_region
        %s591 = ssub.s32 %s14, 1
        %s592 = sand.u32 %s27, 1
        %s593 = sand.u32 %s27, 1
        %s594 = smul.addr %s593, 1024
        %s595 = scalar_lea.vmem [#allocation3], %s594
        // Predicated region
        $region93: #{edge_predictor_forward.1} parent=91 // pred_check
          %p596 = pneg %p40
        $region94: #{edge_predictor_forward.1} parent=91 // pred_check_branch
          %598 = sbr.rel (%p596) target = $region96
        $region95: #{edge_predictor_forward.1} parent=91 // pred_region
          _
        $region96: #{edge_predictor_forward.1} parent=91 // pred_fallthru
          _
        %s599 = sand.u32 %s27, 1
        %s600 = sand.u32 %s27, 1
        %s601 = smul.addr %s600, 1024
        %s602 = scalar_lea.vmem [#allocation3], %s601
        %p603 = pneg %p40
        %p604 = pneg %p37
        %p605 = pneg %p61
        %p606 = pneg %p58
        %p607 = pneg %p82
        %p608 = pneg %p79
        %p609 = pneg %p103
        %p610 = pneg %p100
        %p611 = pneg %p124
        %p612 = pneg %p121
        %p613 = pneg %p145
        %p614 = pneg %p142
        %p615 = pneg %p171
        %p616 = pneg %p168
        %s617 = sand.u32 %s158, 1
        %s618 = sand.u32 %s158, 1
        %s619 = smul.addr %s618, 8
        %s620 = scalar_lea.vmem [#allocation4], %s619
        %s621 = smul.u32 32, %s19
        %s622 = ssub.s32 38, %s621
        %p623 = scmp.lt.s32.totalorder %s622, 32
        %s624 = scalar_select %p623, %s622, 32
        %s625 = smul.u32 512, %s624
        %s626 = smul.u32 2, %s19
        %s627 = ssub.s32 3, %s626
        %p628 = scmp.lt.s32.totalorder %s627, 2
        %s629 = scalar_select %p628, %s627, 2
        %s630 = smul.u32 64, %s629
        %v631 = vld [vmem:[%s595] sm:$0xff]
        %v632 = vld [vmem:[%s595 + $0x8] sm:$0xff]
        %v633 = vld [vmem:[%s595 + $0x10] sm:$0xff]
        %v634 = vld [vmem:[%s595 + $0x18] sm:$0xff]
        %v635 = vld [vmem:[%s595 + $0x20] sm:$0xff]
        %v636 = vld [vmem:[%s595 + $0x28] sm:$0xff]
        %v637 = vld [vmem:[%s595 + $0x30] sm:$0xff]
        %v638 = vld [vmem:[%s595 + $0x38] sm:$0xff]
        %v639 = vld [vmem:[%s595 + $0x40] sm:$0xff]
        %v640 = vld [vmem:[%s595 + $0x48] sm:$0xff]
        %v641 = vld [vmem:[%s595 + $0x50] sm:$0xff]
        %v642 = vld [vmem:[%s595 + $0x58] sm:$0xff]
        %v643 = vld [vmem:[%s595 + $0x60] sm:$0xff]
        %v644 = vld [vmem:[%s595 + $0x68] sm:$0xff]
        %v645 = vld [vmem:[%s595 + $0x70] sm:$0xff]
        %v646 = vld [vmem:[%s595 + $0x78] sm:$0xff]
        %v647 = vld [vmem:[%s595 + $0x80] sm:$0xff]
        %v648 = vld [vmem:[%s595 + $0x88] sm:$0xff]
        %v649 = vld [vmem:[%s595 + $0x90] sm:$0xff]
        %v650 = vld [vmem:[%s595 + $0x98] sm:$0xff]
        %v651 = vld [vmem:[%s595 + $0xa0] sm:$0xff]
        %v652 = vld [vmem:[%s595 + $0xa8] sm:$0xff]
        %v653 = vld [vmem:[%s595 + $0xb0] sm:$0xff]
        %v654 = vld [vmem:[%s595 + $0xb8] sm:$0xff]
        %v655 = vld [vmem:[%s595 + $0xc0] sm:$0xff]
        %v656 = vld [vmem:[%s595 + $0xc8] sm:$0xff]
        %v657 = vld [vmem:[%s595 + $0xd0] sm:$0xff]
        %v658 = vld [vmem:[%s595 + $0xd8] sm:$0xff]
        %v659 = vld [vmem:[%s595 + $0xe0] sm:$0xff]
        %v660 = vld [vmem:[%s595 + $0xe8] sm:$0xff]
        %v661 = vld [vmem:[%s595 + $0xf0] sm:$0xff]
        %v662 = vld [vmem:[%s595 + $0xf8] sm:$0xff]
        %v663 = vld [vmem:[%s1] sm:$0xff]
        %v664 = vld [vmem:[%s1 + $0x8] sm:$0xff]
        %v665 = vld [vmem:[%s1 + $0x10] sm:$0xff]
        %v666 = vld [vmem:[%s1 + $0x18] sm:$0xff]
        %v667 = vld [vmem:[%s1 + $0x20] sm:$0xff]
        %v668 = vld [vmem:[%s1 + $0x28] sm:$0xff]
        %v669 = vld [vmem:[%s1 + $0x30] sm:$0xff]
        %v670 = vld [vmem:[%s1 + $0x38] sm:$0xff]
        %v671 = vld [vmem:[%s1 + $0x40] sm:$0xff]
        %v672 = vld [vmem:[%s1 + $0x48] sm:$0xff]
        %v673 = vld [vmem:[%s1 + $0x50] sm:$0xff]
        %v674 = vld [vmem:[%s1 + $0x58] sm:$0xff]
        %v675 = vld [vmem:[%s1 + $0x60] sm:$0xff]
        %v676 = vld [vmem:[%s1 + $0x68] sm:$0xff]
        %v677 = vld [vmem:[%s1 + $0x70] sm:$0xff]
        %v678 = vld [vmem:[%s1 + $0x78] sm:$0xff]
        %v679 = vld [vmem:[%s3] sm:$0x1]
        %v681 = vlaneseq
        %v682 = vshrl.u32 %v681, 7
        %v683 = vsub.s32 0, %v682
        %v684 = vrot.slane %v679, %v683
        %686 = vmatprep.subr.mxu0 0.0
        %687 = vmatpush1.msra.mxu0 %v663
        %688 = vmatprep.subr.mxu0 0.0
        %689 = vmatpush1.msra.mxu0 %v664
        %690 = vmatprep.subr.mxu0 0.0
        %691 = vmatpush1.msra.mxu0 %v665
        %692 = vmatprep.subr.mxu0 0.0
        %693 = vmatpush1.msra.mxu0 %v666
        %694 = vmatprep.subr.mxu0 0.0
        %695 = vmatpush1.msra.mxu0 %v667
        %696 = vmatprep.subr.mxu0 0.0
        %697 = vmatpush1.msra.mxu0 %v668
        %698 = vmatprep.subr.mxu0 0.0
        %699 = vmatpush1.msra.mxu0 %v669
        %700 = vmatprep.subr.mxu0 0.0
        %701 = vmatpush1.msra.mxu0 %v670
        %702 = vmatprep.subr.mxu0 0.0
        %703 = vmatpush1.msra.mxu0 %v671
        %704 = vmatprep.subr.mxu0 0.0
        %705 = vmatpush1.msra.mxu0 %v672
        %706 = vmatprep.subr.mxu0 0.0
        %707 = vmatpush1.msra.mxu0 %v673
        %708 = vmatprep.subr.mxu0 0.0
        %709 = vmatpush1.msra.mxu0 %v674
        %710 = vmatprep.subr.mxu0 0.0
        %711 = vmatpush1.msra.mxu0 %v675
        %712 = vmatprep.subr.mxu0 0.0
        %713 = vmatpush1.msra.mxu0 %v676
        %714 = vmatprep.subr.mxu0 0.0
        %715 = vmatpush1.msra.mxu0 %v677
        %716 = vmatprep.subr.mxu0 0.0
        %717 = vmatpush1.msra.mxu0 %v678
        %718 = vmatprep.subr.mxu0 0.0
        %719 = vmatpush1.msra.mxu0 0.0
        %720 = vmatprep.subr.mxu0 0.0
        %721 = vmatpush1.msra.mxu0 0.0
        %722 = vmatprep.subr.mxu0 0.0
        %723 = vmatpush1.msra.mxu0 0.0
        %724 = vmatprep.subr.mxu0 0.0
        %725 = vmatpush1.msra.mxu0 0.0
        %726 = vmatprep.subr.mxu0 0.0
        %727 = vmatpush1.msra.mxu0 0.0
        %728 = vmatprep.subr.mxu0 0.0
        %729 = vmatpush1.msra.mxu0 0.0
        %730 = vmatprep.subr.mxu0 0.0
        %731 = vmatpush1.msra.mxu0 0.0
        %732 = vmatprep.subr.mxu0 0.0
        %733 = vmatpush1.msra.mxu0 0.0
        %734 = vmatprep.subr.mxu0 0.0
        %735 = vmatpush1.msra.mxu0 0.0
        %736 = vmatprep.subr.mxu0 0.0
        %737 = vmatpush1.msra.mxu0 0.0
        %738 = vmatprep.subr.mxu0 0.0
        %739 = vmatpush1.msra.mxu0 0.0
        %740 = vmatprep.subr.mxu0 0.0
        %741 = vmatpush1.msra.mxu0 0.0
        %742 = vmatprep.subr.mxu0 0.0
        %743 = vmatpush1.msra.mxu0 0.0
        %744 = vmatprep.subr.mxu0 0.0
        %745 = vmatpush1.msra.mxu0 0.0
        %746 = vmatprep.subr.mxu0 0.0
        %747 = vmatpush1.msra.mxu0 0.0
        %748 = vmatprep.subr.mxu0 0.0
        %749 = vmatpush1.msra.mxu0 0.0
        %750 = vmatprep.mubr.f32.mxu0 0.0
        %751 = vmatmul.mubr.f32.gmra.mrb[0].mxu0 %v631
        %v752 = vpop.f32.mrb[0].mxu0
        %v753 = vadd.f32 %v684, %v752
        %v754 = vpop.f32.mrb[0].mxu0
        %755 = vmatprep.mubr.f32.mxu0 0.0
        %756 = vmatmul.mubr.f32.gmra.mrb[0].mxu0 %v632
        %v757 = vpop.f32.mrb[0].mxu0
        %v758 = vadd.f32 %v684, %v757
        %v759 = vpop.f32.mrb[0].mxu0
        %760 = vmatprep.mubr.f32.mxu0 0.0
        %761 = vmatmul.mubr.f32.gmra.mrb[0].mxu0 %v633
        %v762 = vpop.f32.mrb[0].mxu0
        %v763 = vadd.f32 %v684, %v762
        %v764 = vpop.f32.mrb[0].mxu0
        %765 = vmatprep.mubr.f32.mxu0 0.0
        %766 = vmatmul.mubr.f32.gmra.mrb[0].mxu0 %v634
        %v767 = vpop.f32.mrb[0].mxu0
        %v768 = vadd.f32 %v684, %v767
        %v769 = vpop.f32.mrb[0].mxu0
        %770 = vmatprep.mubr.f32.mxu0 0.0
        %771 = vmatmul.mubr.f32.gmra.mrb[0].mxu0 %v635
        %v772 = vpop.f32.mrb[0].mxu0
        %v773 = vadd.f32 %v684, %v772
        %v774 = vpop.f32.mrb[0].mxu0
        %775 = vmatprep.mubr.f32.mxu0 0.0
        %776 = vmatmul.mubr.f32.gmra.mrb[0].mxu0 %v636
        %v777 = vpop.f32.mrb[0].mxu0
        %v778 = vadd.f32 %v684, %v777
        %v779 = vpop.f32.mrb[0].mxu0
        %780 = vmatprep.mubr.f32.mxu0 0.0
        %781 = vmatmul.mubr.f32.gmra.mrb[0].mxu0 %v637
        %v782 = vpop.f32.mrb[0].mxu0
        %v783 = vadd.f32 %v684, %v782
        %v784 = vpop.f32.mrb[0].mxu0
        %785 = vmatprep.mubr.f32.mxu0 0.0
        %786 = vmatmul.mubr.f32.gmra.mrb[0].mxu0 %v638
        %v787 = vpop.f32.mrb[0].mxu0
        %v788 = vadd.f32 %v684, %v787
        %v789 = vpop.f32.mrb[0].mxu0
        %790 = vmatprep.mubr.f32.mxu0 0.0
        %791 = vmatmul.mubr.f32.gmra.mrb[0].mxu0 %v639
        %v792 = vpop.f32.mrb[0].mxu0
        %v793 = vadd.f32 %v684, %v792
        %v794 = vpop.f32.mrb[0].mxu0
        %795 = vmatprep.mubr.f32.mxu0 0.0
        %796 = vmatmul.mubr.f32.gmra.mrb[0].mxu0 %v640
        %v797 = vpop.f32.mrb[0].mxu0
        %v798 = vadd.f32 %v684, %v797
        %v799 = vpop.f32.mrb[0].mxu0
        %800 = vmatprep.mubr.f32.mxu0 0.0
        %801 = vmatmul.mubr.f32.gmra.mrb[0].mxu0 %v641
        %v802 = vpop.f32.mrb[0].mxu0
        %v803 = vadd.f32 %v684, %v802
        %v804 = vpop.f32.mrb[0].mxu0
        %805 = vmatprep.mubr.f32.mxu0 0.0
        %806 = vmatmul.mubr.f32.gmra.mrb[0].mxu0 %v642
        %v807 = vpop.f32.mrb[0].mxu0
        %v808 = vadd.f32 %v684, %v807
        %v809 = vpop.f32.mrb[0].mxu0
        %810 = vmatprep.mubr.f32.mxu0 0.0
        %811 = vmatmul.mubr.f32.gmra.mrb[0].mxu0 %v643
        %v812 = vpop.f32.mrb[0].mxu0
        %v813 = vadd.f32 %v684, %v812
        %v814 = vpop.f32.mrb[0].mxu0
        %815 = vmatprep.mubr.f32.mxu0 0.0
        %816 = vmatmul.mubr.f32.gmra.mrb[0].mxu0 %v644
        %v817 = vpop.f32.mrb[0].mxu0
        %v818 = vadd.f32 %v684, %v817
        %v819 = vpop.f32.mrb[0].mxu0
        %820 = vmatprep.mubr.f32.mxu0 0.0
        %821 = vmatmul.mubr.f32.gmra.mrb[0].mxu0 %v645
        %v822 = vpop.f32.mrb[0].mxu0
        %v823 = vadd.f32 %v684, %v822
        %v824 = vpop.f32.mrb[0].mxu0
        %825 = vmatprep.mubr.f32.mxu0 0.0
        %826 = vmatmul.mubr.f32.gmra.mrb[0].mxu0 %v646
        %v827 = vpop.f32.mrb[0].mxu0
        %v828 = vadd.f32 %v684, %v827
        %v829 = vpop.f32.mrb[0].mxu0
        %830 = vmatprep.mubr.f32.mxu0 0.0
        %831 = vmatmul.mubr.f32.gmra.mrb[0].mxu0 %v647
        %v832 = vpop.f32.mrb[0].mxu0
        %v833 = vadd.f32 %v684, %v832
        %v834 = vpop.f32.mrb[0].mxu0
        %835 = vmatprep.mubr.f32.mxu0 0.0
        %836 = vmatmul.mubr.f32.gmra.mrb[0].mxu0 %v648
        %v837 = vpop.f32.mrb[0].mxu0
        %v838 = vadd.f32 %v684, %v837
        %v839 = vpop.f32.mrb[0].mxu0
        %840 = vmatprep.mubr.f32.mxu0 0.0
        %841 = vmatmul.mubr.f32.gmra.mrb[0].mxu0 %v649
        %v842 = vpop.f32.mrb[0].mxu0
        %v843 = vadd.f32 %v684, %v842
        %v844 = vpop.f32.mrb[0].mxu0
        %845 = vmatprep.mubr.f32.mxu0 0.0
        %846 = vmatmul.mubr.f32.gmra.mrb[0].mxu0 %v650
        %v847 = vpop.f32.mrb[0].mxu0
        %v848 = vadd.f32 %v684, %v847
        %v849 = vpop.f32.mrb[0].mxu0
        %850 = vmatprep.mubr.f32.mxu0 0.0
        %851 = vmatmul.mubr.f32.gmra.mrb[0].mxu0 %v651
        %v852 = vpop.f32.mrb[0].mxu0
        %v853 = vadd.f32 %v684, %v852
        %v854 = vpop.f32.mrb[0].mxu0
        %855 = vmatprep.mubr.f32.mxu0 0.0
        %856 = vmatmul.mubr.f32.gmra.mrb[0].mxu0 %v652
        %v857 = vpop.f32.mrb[0].mxu0
        %v858 = vadd.f32 %v684, %v857
        %v859 = vpop.f32.mrb[0].mxu0
        %860 = vmatprep.mubr.f32.mxu0 0.0
        %861 = vmatmul.mubr.f32.gmra.mrb[0].mxu0 %v653
        %v862 = vpop.f32.mrb[0].mxu0
        %v863 = vadd.f32 %v684, %v862
        %v864 = vpop.f32.mrb[0].mxu0
        %865 = vmatprep.mubr.f32.mxu0 0.0
        %866 = vmatmul.mubr.f32.gmra.mrb[0].mxu0 %v654
        %v867 = vpop.f32.mrb[0].mxu0
        %v868 = vadd.f32 %v684, %v867
        %v869 = vpop.f32.mrb[0].mxu0
        %870 = vmatprep.mubr.f32.mxu0 0.0
        %871 = vmatmul.mubr.f32.gmra.mrb[0].mxu0 %v655
        %v872 = vpop.f32.mrb[0].mxu0
        %v873 = vadd.f32 %v684, %v872
        %v874 = vpop.f32.mrb[0].mxu0
        %875 = vmatprep.mubr.f32.mxu0 0.0
        %876 = vmatmul.mubr.f32.gmra.mrb[0].mxu0 %v656
        %v877 = vpop.f32.mrb[0].mxu0
        %v878 = vadd.f32 %v684, %v877
        %v879 = vpop.f32.mrb[0].mxu0
        %880 = vmatprep.mubr.f32.mxu0 0.0
        %881 = vmatmul.mubr.f32.gmra.mrb[0].mxu0 %v657
        %v882 = vpop.f32.mrb[0].mxu0
        %v883 = vadd.f32 %v684, %v882
        %v884 = vpop.f32.mrb[0].mxu0
        %885 = vmatprep.mubr.f32.mxu0 0.0
        %886 = vmatmul.mubr.f32.gmra.mrb[0].mxu0 %v658
        %v887 = vpop.f32.mrb[0].mxu0
        %v888 = vadd.f32 %v684, %v887
        %v889 = vpop.f32.mrb[0].mxu0
        %890 = vmatprep.mubr.f32.mxu0 0.0
        %891 = vmatmul.mubr.f32.gmra.mrb[0].mxu0 %v659
        %v892 = vpop.f32.mrb[0].mxu0
        %v893 = vadd.f32 %v684, %v892
        %v894 = vpop.f32.mrb[0].mxu0
        %895 = vmatprep.mubr.f32.mxu0 0.0
        %896 = vmatmul.mubr.f32.gmra.mrb[0].mxu0 %v660
        %v897 = vpop.f32.mrb[0].mxu0
        %v898 = vadd.f32 %v684, %v897
        %v899 = vpop.f32.mrb[0].mxu0
        %900 = vmatprep.mubr.f32.mxu0 0.0
        %901 = vmatmul.mubr.f32.gmra.mrb[0].mxu0 %v661
        %v902 = vpop.f32.mrb[0].mxu0
        %v903 = vadd.f32 %v684, %v902
        %v904 = vpop.f32.mrb[0].mxu0
        %905 = vmatprep.mubr.f32.mxu0 0.0
        %906 = vmatmul.mubr.f32.gmra.mrb[0].mxu0 %v662
        %v907 = vpop.f32.mrb[0].mxu0
        %v908 = vadd.f32 %v684, %v907
        %v909 = vpop.f32.mrb[0].mxu0
        %910 = vdwg.mxu0
        %s911 = scalar_lea.vmem %s595, 256 [#allocation3]
        %v912 = vld [vmem:[%s911] sm:$0xff]
        %v913 = vld [vmem:[%s911 + $0x8] sm:$0xff]
        %v914 = vld [vmem:[%s911 + $0x10] sm:$0xff]
        %v915 = vld [vmem:[%s911 + $0x18] sm:$0xff]
        %v916 = vld [vmem:[%s911 + $0x20] sm:$0xff]
        %v917 = vld [vmem:[%s911 + $0x28] sm:$0xff]
        %v918 = vld [vmem:[%s911 + $0x30] sm:$0xff]
        %v919 = vld [vmem:[%s911 + $0x38] sm:$0xff]
        %v920 = vld [vmem:[%s911 + $0x40] sm:$0xff]
        %v921 = vld [vmem:[%s911 + $0x48] sm:$0xff]
        %v922 = vld [vmem:[%s911 + $0x50] sm:$0xff]
        %v923 = vld [vmem:[%s911 + $0x58] sm:$0xff]
        %v924 = vld [vmem:[%s911 + $0x60] sm:$0xff]
        %v925 = vld [vmem:[%s911 + $0x68] sm:$0xff]
        %v926 = vld [vmem:[%s911 + $0x70] sm:$0xff]
        %v927 = vld [vmem:[%s911 + $0x78] sm:$0xff]
        %v928 = vld [vmem:[%s911 + $0x80] sm:$0xff]
        %v929 = vld [vmem:[%s911 + $0x88] sm:$0xff]
        %v930 = vld [vmem:[%s911 + $0x90] sm:$0xff]
        %v931 = vld [vmem:[%s911 + $0x98] sm:$0xff]
        %v932 = vld [vmem:[%s911 + $0xa0] sm:$0xff]
        %v933 = vld [vmem:[%s911 + $0xa8] sm:$0xff]
        %v934 = vld [vmem:[%s911 + $0xb0] sm:$0xff]
        %v935 = vld [vmem:[%s911 + $0xb8] sm:$0xff]
        %v936 = vld [vmem:[%s911 + $0xc0] sm:$0xff]
        %v937 = vld [vmem:[%s911 + $0xc8] sm:$0xff]
        %v938 = vld [vmem:[%s911 + $0xd0] sm:$0xff]
        %v939 = vld [vmem:[%s911 + $0xd8] sm:$0xff]
        %v940 = vld [vmem:[%s911 + $0xe0] sm:$0xff]
        %v941 = vld [vmem:[%s911 + $0xe8] sm:$0xff]
        %v942 = vld [vmem:[%s911 + $0xf0] sm:$0xff]
        %v943 = vld [vmem:[%s911 + $0xf8] sm:$0xff]
        %v944 = vld [vmem:[%s911 + $0x100] sm:$0xff]
        %v945 = vld [vmem:[%s911 + $0x108] sm:$0xff]
        %v946 = vld [vmem:[%s911 + $0x110] sm:$0xff]
        %v947 = vld [vmem:[%s911 + $0x118] sm:$0xff]
        %v948 = vld [vmem:[%s911 + $0x120] sm:$0xff]
        %v949 = vld [vmem:[%s911 + $0x128] sm:$0xff]
        %v950 = vld [vmem:[%s911 + $0x130] sm:$0xff]
        %v951 = vld [vmem:[%s911 + $0x138] sm:$0xff]
        %v952 = vld [vmem:[%s911 + $0x140] sm:$0xff]
        %v953 = vld [vmem:[%s911 + $0x148] sm:$0xff]
        %v954 = vld [vmem:[%s911 + $0x150] sm:$0xff]
        %v955 = vld [vmem:[%s911 + $0x158] sm:$0xff]
        %v956 = vld [vmem:[%s911 + $0x160] sm:$0xff]
        %v957 = vld [vmem:[%s911 + $0x168] sm:$0xff]
        %v958 = vld [vmem:[%s911 + $0x170] sm:$0xff]
        %v959 = vld [vmem:[%s911 + $0x178] sm:$0xff]
        %v960 = vld [vmem:[%s911 + $0x180] sm:$0xff]
        %v961 = vld [vmem:[%s911 + $0x188] sm:$0xff]
        %v962 = vld [vmem:[%s911 + $0x190] sm:$0xff]
        %v963 = vld [vmem:[%s911 + $0x198] sm:$0xff]
        %v964 = vld [vmem:[%s911 + $0x1a0] sm:$0xff]
        %v965 = vld [vmem:[%s911 + $0x1a8] sm:$0xff]
        %v966 = vld [vmem:[%s911 + $0x1b0] sm:$0xff]
        %v967 = vld [vmem:[%s911 + $0x1b8] sm:$0xff]
        %v968 = vld [vmem:[%s911 + $0x1c0] sm:$0xff]
        %v969 = vld [vmem:[%s911 + $0x1c8] sm:$0xff]
        %v970 = vld [vmem:[%s911 + $0x1d0] sm:$0xff]
        %v971 = vld [vmem:[%s911 + $0x1d8] sm:$0xff]
        %v972 = vld [vmem:[%s911 + $0x1e0] sm:$0xff]
        %v973 = vld [vmem:[%s911 + $0x1e8] sm:$0xff]
        %v974 = vld [vmem:[%s911 + $0x1f0] sm:$0xff]
        %v975 = vld [vmem:[%s911 + $0x1f8] sm:$0xff]
        %v976 = vld [vmem:[%s911 + $0x200] sm:$0xff]
        %v977 = vld [vmem:[%s911 + $0x208] sm:$0xff]
        %v978 = vld [vmem:[%s911 + $0x210] sm:$0xff]
        %v979 = vld [vmem:[%s911 + $0x218] sm:$0xff]
        %v980 = vld [vmem:[%s911 + $0x220] sm:$0xff]
        %v981 = vld [vmem:[%s911 + $0x228] sm:$0xff]
        %v982 = vld [vmem:[%s911 + $0x230] sm:$0xff]
        %v983 = vld [vmem:[%s911 + $0x238] sm:$0xff]
        %v984 = vld [vmem:[%s911 + $0x240] sm:$0xff]
        %v985 = vld [vmem:[%s911 + $0x248] sm:$0xff]
        %v986 = vld [vmem:[%s911 + $0x250] sm:$0xff]
        %v987 = vld [vmem:[%s911 + $0x258] sm:$0xff]
        %v988 = vld [vmem:[%s911 + $0x260] sm:$0xff]
        %v989 = vld [vmem:[%s911 + $0x268] sm:$0xff]
        %v990 = vld [vmem:[%s911 + $0x270] sm:$0xff]
        %v991 = vld [vmem:[%s911 + $0x278] sm:$0xff]
        %v992 = vld [vmem:[%s911 + $0x280] sm:$0xff]
        %v993 = vld [vmem:[%s911 + $0x288] sm:$0xff]
        %v994 = vld [vmem:[%s911 + $0x290] sm:$0xff]
        %v995 = vld [vmem:[%s911 + $0x298] sm:$0xff]
        %v996 = vld [vmem:[%s911 + $0x2a0] sm:$0xff]
        %v997 = vld [vmem:[%s911 + $0x2a8] sm:$0xff]
        %v998 = vld [vmem:[%s911 + $0x2b0] sm:$0xff]
        %v999 = vld [vmem:[%s911 + $0x2b8] sm:$0xff]
        %v1000 = vld [vmem:[%s911 + $0x2c0] sm:$0xff]
        %v1001 = vld [vmem:[%s911 + $0x2c8] sm:$0xff]
        %v1002 = vld [vmem:[%s911 + $0x2d0] sm:$0xff]
        %v1003 = vld [vmem:[%s911 + $0x2d8] sm:$0xff]
        %v1004 = vld [vmem:[%s911 + $0x2e0] sm:$0xff]
        %v1005 = vld [vmem:[%s911 + $0x2e8] sm:$0xff]
        %v1006 = vld [vmem:[%s911 + $0x2f0] sm:$0xff]
        %v1007 = vld [vmem:[%s911 + $0x2f8] sm:$0xff]
        %v1008 = vld [vmem:[%s2] sm:$0xff]
        %v1009 = vld [vmem:[%s2 + $0x8] sm:$0xff]
        %v1010 = vld [vmem:[%s2 + $0x10] sm:$0xff]
        %v1011 = vld [vmem:[%s2 + $0x18] sm:$0xff]
        %v1012 = vld [vmem:[%s2 + $0x20] sm:$0xff]
        %v1013 = vld [vmem:[%s2 + $0x28] sm:$0xff]
        %v1014 = vld [vmem:[%s2 + $0x30] sm:$0xff]
        %v1015 = vld [vmem:[%s2 + $0x38] sm:$0xff]
        %v1016 = vld [vmem:[%s2 + $0x40] sm:$0xff]
        %v1017 = vld [vmem:[%s2 + $0x48] sm:$0xff]
        %v1018 = vld [vmem:[%s2 + $0x50] sm:$0xff]
        %v1019 = vld [vmem:[%s2 + $0x58] sm:$0xff]
        %v1020 = vld [vmem:[%s2 + $0x60] sm:$0xff]
        %v1021 = vld [vmem:[%s2 + $0x68] sm:$0xff]
        %v1022 = vld [vmem:[%s2 + $0x70] sm:$0xff]
        %v1023 = vld [vmem:[%s2 + $0x78] sm:$0xff]
        %1024 = vmatprep.subr.mxu0 0.0
        %1025 = vmatpush1.msra.mxu0 %v1008
        %1026 = vmatprep.subr.mxu0 0.0
        %1027 = vmatpush1.msra.mxu0 %v1009
        %1028 = vmatprep.subr.mxu0 0.0
        %1029 = vmatpush1.msra.mxu0 %v1010
        %1030 = vmatprep.subr.mxu0 0.0
        %1031 = vmatpush1.msra.mxu0 %v1011
        %1032 = vmatprep.subr.mxu0 0.0
        %1033 = vmatpush1.msra.mxu0 %v1012
        %1034 = vmatprep.subr.mxu0 0.0
        %1035 = vmatpush1.msra.mxu0 %v1013
        %1036 = vmatprep.subr.mxu0 0.0
        %1037 = vmatpush1.msra.mxu0 %v1014
        %1038 = vmatprep.subr.mxu0 0.0
        %1039 = vmatpush1.msra.mxu0 %v1015
        %1040 = vmatprep.subr.mxu0 0.0
        %1041 = vmatpush1.msra.mxu0 %v1016
        %1042 = vmatprep.subr.mxu0 0.0
        %1043 = vmatpush1.msra.mxu0 %v1017
        %1044 = vmatprep.subr.mxu0 0.0
        %1045 = vmatpush1.msra.mxu0 %v1018
        %1046 = vmatprep.subr.mxu0 0.0
        %1047 = vmatpush1.msra.mxu0 %v1019
        %1048 = vmatprep.subr.mxu0 0.0
        %1049 = vmatpush1.msra.mxu0 %v1020
        %1050 = vmatprep.subr.mxu0 0.0
        %1051 = vmatpush1.msra.mxu0 %v1021
        %1052 = vmatprep.subr.mxu0 0.0
        %1053 = vmatpush1.msra.mxu0 %v1022
        %1054 = vmatprep.subr.mxu0 0.0
        %1055 = vmatpush1.msra.mxu0 %v1023
        %1056 = vmatprep.subr.mxu0 0.0
        %1057 = vmatpush1.msra.mxu0 0.0
        %1058 = vmatprep.subr.mxu0 0.0
        %1059 = vmatpush1.msra.mxu0 0.0
        %1060 = vmatprep.subr.mxu0 0.0
        %1061 = vmatpush1.msra.mxu0 0.0
        %1062 = vmatprep.subr.mxu0 0.0
        %1063 = vmatpush1.msra.mxu0 0.0
        %1064 = vmatprep.subr.mxu0 0.0
        %1065 = vmatpush1.msra.mxu0 0.0
        %1066 = vmatprep.subr.mxu0 0.0
        %1067 = vmatpush1.msra.mxu0 0.0
        %1068 = vmatprep.subr.mxu0 0.0
        %1069 = vmatpush1.msra.mxu0 0.0
        %1070 = vmatprep.subr.mxu0 0.0
        %1071 = vmatpush1.msra.mxu0 0.0
        %1072 = vmatprep.subr.mxu0 0.0
        %1073 = vmatpush1.msra.mxu0 0.0
        %1074 = vmatprep.subr.mxu0 0.0
        %1075 = vmatpush1.msra.mxu0 0.0
        %1076 = vmatprep.subr.mxu0 0.0
        %1077 = vmatpush1.msra.mxu0 0.0
        %1078 = vmatprep.subr.mxu0 0.0
        %1079 = vmatpush1.msra.mxu0 0.0
        %1080 = vmatprep.subr.mxu0 0.0
        %1081 = vmatpush1.msra.mxu0 0.0
        %1082 = vmatprep.subr.mxu0 0.0
        %1083 = vmatpush1.msra.mxu0 0.0
        %1084 = vmatprep.subr.mxu0 0.0
        %1085 = vmatpush1.msra.mxu0 0.0
        %1086 = vmatprep.subr.mxu0 0.0
        %1087 = vmatpush1.msra.mxu0 0.0
        %1088 = vmatprep.mubr.f32.mxu0 0.0
        %1089 = vmatmul.mubr.f32.gmra.mrb[0].mxu0 %v912
        %v1090 = vpop.f32.mrb[0].mxu0
        %v1091 = vadd.f32 0.0, %v1090
        %v1092 = vpop.f32.mrb[0].mxu0
        %1093 = vmatprep.mubr.f32.mxu0 0.0
        %1094 = vmatmul.mubr.f32.gmra.mrb[0].mxu0 %v913
        %v1095 = vpop.f32.mrb[0].mxu0
        %v1096 = vadd.f32 0.0, %v1095
        %v1097 = vpop.f32.mrb[0].mxu0
        %1098 = vmatprep.mubr.f32.mxu0 0.0
        %1099 = vmatmul.mubr.f32.gmra.mrb[0].mxu0 %v914
        %v1100 = vpop.f32.mrb[0].mxu0
        %v1101 = vadd.f32 0.0, %v1100
        %v1102 = vpop.f32.mrb[0].mxu0
        %1103 = vmatprep.mubr.f32.mxu0 0.0
        %1104 = vmatmul.mubr.f32.gmra.mrb[0].mxu0 %v915
        %v1105 = vpop.f32.mrb[0].mxu0
        %v1106 = vadd.f32 0.0, %v1105
        %v1107 = vpop.f32.mrb[0].mxu0
        %1108 = vmatprep.mubr.f32.mxu0 0.0
        %1109 = vmatmul.mubr.f32.gmra.mrb[0].mxu0 %v916
        %v1110 = vpop.f32.mrb[0].mxu0
        %v1111 = vadd.f32 0.0, %v1110
        %v1112 = vpop.f32.mrb[0].mxu0
        %1113 = vmatprep.mubr.f32.mxu0 0.0
        %1114 = vmatmul.mubr.f32.gmra.mrb[0].mxu0 %v917
        %v1115 = vpop.f32.mrb[0].mxu0
        %v1116 = vadd.f32 0.0, %v1115
        %v1117 = vpop.f32.mrb[0].mxu0
        %1118 = vmatprep.mubr.f32.mxu0 0.0
        %1119 = vmatmul.mubr.f32.gmra.mrb[0].mxu0 %v918
        %v1120 = vpop.f32.mrb[0].mxu0
        %v1121 = vadd.f32 0.0, %v1120
        %v1122 = vpop.f32.mrb[0].mxu0
        %1123 = vmatprep.mubr.f32.mxu0 0.0
        %1124 = vmatmul.mubr.f32.gmra.mrb[0].mxu0 %v919
        %v1125 = vpop.f32.mrb[0].mxu0
        %v1126 = vadd.f32 0.0, %v1125
        %v1127 = vpop.f32.mrb[0].mxu0
        %1128 = vmatprep.mubr.f32.mxu0 0.0
        %1129 = vmatmul.mubr.f32.gmra.mrb[0].mxu0 %v920
        %v1130 = vpop.f32.mrb[0].mxu0
        %v1131 = vadd.f32 0.0, %v1130
        %v1132 = vpop.f32.mrb[0].mxu0
        %1133 = vmatprep.mubr.f32.mxu0 0.0
        %1134 = vmatmul.mubr.f32.gmra.mrb[0].mxu0 %v921
        %v1135 = vpop.f32.mrb[0].mxu0
        %v1136 = vadd.f32 0.0, %v1135
        %v1137 = vpop.f32.mrb[0].mxu0
        %1138 = vmatprep.mubr.f32.mxu0 0.0
        %1139 = vmatmul.mubr.f32.gmra.mrb[0].mxu0 %v922
        %v1140 = vpop.f32.mrb[0].mxu0
        %v1141 = vadd.f32 0.0, %v1140
        %v1142 = vpop.f32.mrb[0].mxu0
        %1143 = vmatprep.mubr.f32.mxu0 0.0
        %1144 = vmatmul.mubr.f32.gmra.mrb[0].mxu0 %v923
        %v1145 = vpop.f32.mrb[0].mxu0
        %v1146 = vadd.f32 0.0, %v1145
        %v1147 = vpop.f32.mrb[0].mxu0
        %1148 = vmatprep.mubr.f32.mxu0 0.0
        %1149 = vmatmul.mubr.f32.gmra.mrb[0].mxu0 %v924
        %v1150 = vpop.f32.mrb[0].mxu0
        %v1151 = vadd.f32 0.0, %v1150
        %v1152 = vpop.f32.mrb[0].mxu0
        %1153 = vmatprep.mubr.f32.mxu0 0.0
        %1154 = vmatmul.mubr.f32.gmra.mrb[0].mxu0 %v925
        %v1155 = vpop.f32.mrb[0].mxu0
        %v1156 = vadd.f32 0.0, %v1155
        %v1157 = vpop.f32.mrb[0].mxu0
        %1158 = vmatprep.mubr.f32.mxu0 0.0
        %1159 = vmatmul.mubr.f32.gmra.mrb[0].mxu0 %v926
        %v1160 = vpop.f32.mrb[0].mxu0
        %v1161 = vadd.f32 0.0, %v1160
        %v1162 = vpop.f32.mrb[0].mxu0
        %1163 = vmatprep.mubr.f32.mxu0 0.0
        %1164 = vmatmul.mubr.f32.gmra.mrb[0].mxu0 %v927
        %v1165 = vpop.f32.mrb[0].mxu0
        %v1166 = vadd.f32 0.0, %v1165
        %v1167 = vpop.f32.mrb[0].mxu0
        %1168 = vmatprep.mubr.f32.mxu0 0.0
        %1169 = vmatmul.mubr.f32.gmra.mrb[0].mxu0 %v928
        %v1170 = vpop.f32.mrb[0].mxu0
        %v1171 = vadd.f32 0.0, %v1170
        %v1172 = vpop.f32.mrb[0].mxu0
        %1173 = vmatprep.mubr.f32.mxu0 0.0
        %1174 = vmatmul.mubr.f32.gmra.mrb[0].mxu0 %v929
        %v1175 = vpop.f32.mrb[0].mxu0
        %v1176 = vadd.f32 0.0, %v1175
        %v1177 = vpop.f32.mrb[0].mxu0
        %1178 = vmatprep.mubr.f32.mxu0 0.0
        %1179 = vmatmul.mubr.f32.gmra.mrb[0].mxu0 %v930
        %v1180 = vpop.f32.mrb[0].mxu0
        %v1181 = vadd.f32 0.0, %v1180
        %v1182 = vpop.f32.mrb[0].mxu0
        %1183 = vmatprep.mubr.f32.mxu0 0.0
        %1184 = vmatmul.mubr.f32.gmra.mrb[0].mxu0 %v931
        %v1185 = vpop.f32.mrb[0].mxu0
        %v1186 = vadd.f32 0.0, %v1185
        %v1187 = vpop.f32.mrb[0].mxu0
        %1188 = vmatprep.mubr.f32.mxu0 0.0
        %1189 = vmatmul.mubr.f32.gmra.mrb[0].mxu0 %v932
        %v1190 = vpop.f32.mrb[0].mxu0
        %v1191 = vadd.f32 0.0, %v1190
        %v1192 = vpop.f32.mrb[0].mxu0
        %1193 = vmatprep.mubr.f32.mxu0 0.0
        %1194 = vmatmul.mubr.f32.gmra.mrb[0].mxu0 %v933
        %v1195 = vpop.f32.mrb[0].mxu0
        %v1196 = vadd.f32 0.0, %v1195
        %v1197 = vpop.f32.mrb[0].mxu0
        %1198 = vmatprep.mubr.f32.mxu0 0.0
        %1199 = vmatmul.mubr.f32.gmra.mrb[0].mxu0 %v934
        %v1200 = vpop.f32.mrb[0].mxu0
        %v1201 = vadd.f32 0.0, %v1200
        %v1202 = vpop.f32.mrb[0].mxu0
        %1203 = vmatprep.mubr.f32.mxu0 0.0
        %1204 = vmatmul.mubr.f32.gmra.mrb[0].mxu0 %v935
        %v1205 = vpop.f32.mrb[0].mxu0
        %v1206 = vadd.f32 0.0, %v1205
        %v1207 = vpop.f32.mrb[0].mxu0
        %1208 = vmatprep.mubr.f32.mxu0 0.0
        %1209 = vmatmul.mubr.f32.gmra.mrb[0].mxu0 %v936
        %v1210 = vpop.f32.mrb[0].mxu0
        %v1211 = vadd.f32 0.0, %v1210
        %v1212 = vpop.f32.mrb[0].mxu0
        %1213 = vmatprep.mubr.f32.mxu0 0.0
        %1214 = vmatmul.mubr.f32.gmra.mrb[0].mxu0 %v937
        %v1215 = vpop.f32.mrb[0].mxu0
        %v1216 = vadd.f32 0.0, %v1215
        %v1217 = vpop.f32.mrb[0].mxu0
        %1218 = vmatprep.mubr.f32.mxu0 0.0
        %1219 = vmatmul.mubr.f32.gmra.mrb[0].mxu0 %v938
        %v1220 = vpop.f32.mrb[0].mxu0
        %v1221 = vadd.f32 0.0, %v1220
        %v1222 = vpop.f32.mrb[0].mxu0
        %1223 = vmatprep.mubr.f32.mxu0 0.0
        %1224 = vmatmul.mubr.f32.gmra.mrb[0].mxu0 %v939
        %v1225 = vpop.f32.mrb[0].mxu0
        %v1226 = vadd.f32 0.0, %v1225
        %v1227 = vpop.f32.mrb[0].mxu0
        %1228 = vmatprep.mubr.f32.mxu0 0.0
        %1229 = vmatmul.mubr.f32.gmra.mrb[0].mxu0 %v940
        %v1230 = vpop.f32.mrb[0].mxu0
        %v1231 = vadd.f32 0.0, %v1230
        %v1232 = vpop.f32.mrb[0].mxu0
        %1233 = vmatprep.mubr.f32.mxu0 0.0
        %1234 = vmatmul.mubr.f32.gmra.mrb[0].mxu0 %v941
        %v1235 = vpop.f32.mrb[0].mxu0
        %v1236 = vadd.f32 0.0, %v1235
        %v1237 = vpop.f32.mrb[0].mxu0
        %1238 = vmatprep.mubr.f32.mxu0 0.0
        %1239 = vmatmul.mubr.f32.gmra.mrb[0].mxu0 %v942
        %v1240 = vpop.f32.mrb[0].mxu0
        %v1241 = vadd.f32 0.0, %v1240
        %v1242 = vpop.f32.mrb[0].mxu0
        %1243 = vmatprep.mubr.f32.mxu0 0.0
        %1244 = vmatmul.mubr.f32.gmra.mrb[0].mxu0 %v943
        %v1245 = vpop.f32.mrb[0].mxu0
        %v1246 = vadd.f32 0.0, %v1245
        %v1247 = vpop.f32.mrb[0].mxu0
        %1248 = vmatprep.mubr.f32.mxu0 0.0
        %1249 = vmatmul.mubr.f32.gmra.mrb[0].mxu0 %v944
        %v1250 = vpop.f32.mrb[0].mxu0
        %v1251 = vadd.f32 0.0, %v1250
        %v1252 = vpop.f32.mrb[0].mxu0
        %1253 = vmatprep.mubr.f32.mxu0 0.0
        %1254 = vmatmul.mubr.f32.gmra.mrb[0].mxu0 %v945
        %v1255 = vpop.f32.mrb[0].mxu0
        %v1256 = vadd.f32 0.0, %v1255
        %v1257 = vpop.f32.mrb[0].mxu0
        %1258 = vmatprep.mubr.f32.mxu0 0.0
        %1259 = vmatmul.mubr.f32.gmra.mrb[0].mxu0 %v946
        %v1260 = vpop.f32.mrb[0].mxu0
        %v1261 = vadd.f32 0.0, %v1260
        %v1262 = vpop.f32.mrb[0].mxu0
        %1263 = vmatprep.mubr.f32.mxu0 0.0
        %1264 = vmatmul.mubr.f32.gmra.mrb[0].mxu0 %v947
        %v1265 = vpop.f32.mrb[0].mxu0
        %v1266 = vadd.f32 0.0, %v1265
        %v1267 = vpop.f32.mrb[0].mxu0
        %1268 = vmatprep.mubr.f32.mxu0 0.0
        %1269 = vmatmul.mubr.f32.gmra.mrb[0].mxu0 %v948
        %v1270 = vpop.f32.mrb[0].mxu0
        %v1271 = vadd.f32 0.0, %v1270
        %v1272 = vpop.f32.mrb[0].mxu0
        %1273 = vmatprep.mubr.f32.mxu0 0.0
        %1274 = vmatmul.mubr.f32.gmra.mrb[0].mxu0 %v949
        %v1275 = vpop.f32.mrb[0].mxu0
        %v1276 = vadd.f32 0.0, %v1275
        %v1277 = vpop.f32.mrb[0].mxu0
        %1278 = vmatprep.mubr.f32.mxu0 0.0
        %1279 = vmatmul.mubr.f32.gmra.mrb[0].mxu0 %v950
        %v1280 = vpop.f32.mrb[0].mxu0
        %v1281 = vadd.f32 0.0, %v1280
        %v1282 = vpop.f32.mrb[0].mxu0
        %1283 = vmatprep.mubr.f32.mxu0 0.0
        %1284 = vmatmul.mubr.f32.gmra.mrb[0].mxu0 %v951
        %v1285 = vpop.f32.mrb[0].mxu0
        %v1286 = vadd.f32 0.0, %v1285
        %v1287 = vpop.f32.mrb[0].mxu0
        %1288 = vmatprep.mubr.f32.mxu0 0.0
        %1289 = vmatmul.mubr.f32.gmra.mrb[0].mxu0 %v952
        %v1290 = vpop.f32.mrb[0].mxu0
        %v1291 = vadd.f32 0.0, %v1290
        %v1292 = vpop.f32.mrb[0].mxu0
        %1293 = vmatprep.mubr.f32.mxu0 0.0
        %1294 = vmatmul.mubr.f32.gmra.mrb[0].mxu0 %v953
        %v1295 = vpop.f32.mrb[0].mxu0
        %v1296 = vadd.f32 0.0, %v1295
        %v1297 = vpop.f32.mrb[0].mxu0
        %1298 = vmatprep.mubr.f32.mxu0 0.0
        %1299 = vmatmul.mubr.f32.gmra.mrb[0].mxu0 %v954
        %v1300 = vpop.f32.mrb[0].mxu0
        %v1301 = vadd.f32 0.0, %v1300
        %v1302 = vpop.f32.mrb[0].mxu0
        %1303 = vmatprep.mubr.f32.mxu0 0.0
        %1304 = vmatmul.mubr.f32.gmra.mrb[0].mxu0 %v955
        %v1305 = vpop.f32.mrb[0].mxu0
        %v1306 = vadd.f32 0.0, %v1305
        %v1307 = vpop.f32.mrb[0].mxu0
        %1308 = vmatprep.mubr.f32.mxu0 0.0
        %1309 = vmatmul.mubr.f32.gmra.mrb[0].mxu0 %v956
        %v1310 = vpop.f32.mrb[0].mxu0
        %v1311 = vadd.f32 0.0, %v1310
        %v1312 = vpop.f32.mrb[0].mxu0
        %1313 = vmatprep.mubr.f32.mxu0 0.0
        %1314 = vmatmul.mubr.f32.gmra.mrb[0].mxu0 %v957
        %v1315 = vpop.f32.mrb[0].mxu0
        %v1316 = vadd.f32 0.0, %v1315
        %v1317 = vpop.f32.mrb[0].mxu0
        %1318 = vmatprep.mubr.f32.mxu0 0.0
        %1319 = vmatmul.mubr.f32.gmra.mrb[0].mxu0 %v958
        %v1320 = vpop.f32.mrb[0].mxu0
        %v1321 = vadd.f32 0.0, %v1320
        %v1322 = vpop.f32.mrb[0].mxu0
        %1323 = vmatprep.mubr.f32.mxu0 0.0
        %1324 = vmatmul.mubr.f32.gmra.mrb[0].mxu0 %v959
        %v1325 = vpop.f32.mrb[0].mxu0
        %v1326 = vadd.f32 0.0, %v1325
        %v1327 = vpop.f32.mrb[0].mxu0
        %1328 = vmatprep.mubr.f32.mxu0 0.0
        %1329 = vmatmul.mubr.f32.gmra.mrb[0].mxu0 %v960
        %v1330 = vpop.f32.mrb[0].mxu0
        %v1331 = vadd.f32 0.0, %v1330
        %v1332 = vpop.f32.mrb[0].mxu0
        %1333 = vmatprep.mubr.f32.mxu0 0.0
        %1334 = vmatmul.mubr.f32.gmra.mrb[0].mxu0 %v961
        %v1335 = vpop.f32.mrb[0].mxu0
        %v1336 = vadd.f32 0.0, %v1335
        %v1337 = vpop.f32.mrb[0].mxu0
        %1338 = vmatprep.mubr.f32.mxu0 0.0
        %1339 = vmatmul.mubr.f32.gmra.mrb[0].mxu0 %v962
        %v1340 = vpop.f32.mrb[0].mxu0
        %v1341 = vadd.f32 0.0, %v1340
        %v1342 = vpop.f32.mrb[0].mxu0
        %1343 = vmatprep.mubr.f32.mxu0 0.0
        %1344 = vmatmul.mubr.f32.gmra.mrb[0].mxu0 %v963
        %v1345 = vpop.f32.mrb[0].mxu0
        %v1346 = vadd.f32 0.0, %v1345
        %v1347 = vpop.f32.mrb[0].mxu0
        %1348 = vmatprep.mubr.f32.mxu0 0.0
        %1349 = vmatmul.mubr.f32.gmra.mrb[0].mxu0 %v964
        %v1350 = vpop.f32.mrb[0].mxu0
        %v1351 = vadd.f32 0.0, %v1350
        %v1352 = vpop.f32.mrb[0].mxu0
        %1353 = vmatprep.mubr.f32.mxu0 0.0
        %1354 = vmatmul.mubr.f32.gmra.mrb[0].mxu0 %v965
        %v1355 = vpop.f32.mrb[0].mxu0
        %v1356 = vadd.f32 0.0, %v1355
        %v1357 = vpop.f32.mrb[0].mxu0
        %1358 = vmatprep.mubr.f32.mxu0 0.0
        %1359 = vmatmul.mubr.f32.gmra.mrb[0].mxu0 %v966
        %v1360 = vpop.f32.mrb[0].mxu0
        %v1361 = vadd.f32 0.0, %v1360
        %v1362 = vpop.f32.mrb[0].mxu0
        %1363 = vmatprep.mubr.f32.mxu0 0.0
        %1364 = vmatmul.mubr.f32.gmra.mrb[0].mxu0 %v967
        %v1365 = vpop.f32.mrb[0].mxu0
        %v1366 = vadd.f32 0.0, %v1365
        %v1367 = vpop.f32.mrb[0].mxu0
        %1368 = vmatprep.mubr.f32.mxu0 0.0
        %1369 = vmatmul.mubr.f32.gmra.mrb[0].mxu0 %v968
        %v1370 = vpop.f32.mrb[0].mxu0
        %v1371 = vadd.f32 0.0, %v1370
        %v1372 = vpop.f32.mrb[0].mxu0
        %1373 = vmatprep.mubr.f32.mxu0 0.0
        %1374 = vmatmul.mubr.f32.gmra.mrb[0].mxu0 %v969
        %v1375 = vpop.f32.mrb[0].mxu0
        %v1376 = vadd.f32 0.0, %v1375
        %v1377 = vpop.f32.mrb[0].mxu0
        %1378 = vmatprep.mubr.f32.mxu0 0.0
        %1379 = vmatmul.mubr.f32.gmra.mrb[0].mxu0 %v970
        %v1380 = vpop.f32.mrb[0].mxu0
        %v1381 = vadd.f32 0.0, %v1380
        %v1382 = vpop.f32.mrb[0].mxu0
        %1383 = vmatprep.mubr.f32.mxu0 0.0
        %1384 = vmatmul.mubr.f32.gmra.mrb[0].mxu0 %v971
        %v1385 = vpop.f32.mrb[0].mxu0
        %v1386 = vadd.f32 0.0, %v1385
        %v1387 = vpop.f32.mrb[0].mxu0
        %1388 = vmatprep.mubr.f32.mxu0 0.0
        %1389 = vmatmul.mubr.f32.gmra.mrb[0].mxu0 %v972
        %v1390 = vpop.f32.mrb[0].mxu0
        %v1391 = vadd.f32 0.0, %v1390
        %v1392 = vpop.f32.mrb[0].mxu0
        %1393 = vmatprep.mubr.f32.mxu0 0.0
        %1394 = vmatmul.mubr.f32.gmra.mrb[0].mxu0 %v973
        %v1395 = vpop.f32.mrb[0].mxu0
        %v1396 = vadd.f32 0.0, %v1395
        %v1397 = vpop.f32.mrb[0].mxu0
        %1398 = vmatprep.mubr.f32.mxu0 0.0
        %1399 = vmatmul.mubr.f32.gmra.mrb[0].mxu0 %v974
        %v1400 = vpop.f32.mrb[0].mxu0
        %v1401 = vadd.f32 0.0, %v1400
        %v1402 = vpop.f32.mrb[0].mxu0
        %1403 = vmatprep.mubr.f32.mxu0 0.0
        %1404 = vmatmul.mubr.f32.gmra.mrb[0].mxu0 %v975
        %v1405 = vpop.f32.mrb[0].mxu0
        %v1406 = vadd.f32 0.0, %v1405
        %v1407 = vpop.f32.mrb[0].mxu0
        %1408 = vmatprep.mubr.f32.mxu0 0.0
        %1409 = vmatmul.mubr.f32.gmra.mrb[0].mxu0 %v976
        %v1410 = vpop.f32.mrb[0].mxu0
        %v1411 = vadd.f32 0.0, %v1410
        %v1412 = vpop.f32.mrb[0].mxu0
        %1413 = vmatprep.mubr.f32.mxu0 0.0
        %1414 = vmatmul.mubr.f32.gmra.mrb[0].mxu0 %v977
        %v1415 = vpop.f32.mrb[0].mxu0
        %v1416 = vadd.f32 0.0, %v1415
        %v1417 = vpop.f32.mrb[0].mxu0
        %1418 = vmatprep.mubr.f32.mxu0 0.0
        %1419 = vmatmul.mubr.f32.gmra.mrb[0].mxu0 %v978
        %v1420 = vpop.f32.mrb[0].mxu0
        %v1421 = vadd.f32 0.0, %v1420
        %v1422 = vpop.f32.mrb[0].mxu0
        %1423 = vmatprep.mubr.f32.mxu0 0.0
        %1424 = vmatmul.mubr.f32.gmra.mrb[0].mxu0 %v979
        %v1425 = vpop.f32.mrb[0].mxu0
        %v1426 = vadd.f32 0.0, %v1425
        %v1427 = vpop.f32.mrb[0].mxu0
        %1428 = vmatprep.mubr.f32.mxu0 0.0
        %1429 = vmatmul.mubr.f32.gmra.mrb[0].mxu0 %v980
        %v1430 = vpop.f32.mrb[0].mxu0
        %v1431 = vadd.f32 0.0, %v1430
        %v1432 = vpop.f32.mrb[0].mxu0
        %1433 = vmatprep.mubr.f32.mxu0 0.0
        %1434 = vmatmul.mubr.f32.gmra.mrb[0].mxu0 %v981
        %v1435 = vpop.f32.mrb[0].mxu0
        %v1436 = vadd.f32 0.0, %v1435
        %v1437 = vpop.f32.mrb[0].mxu0
        %1438 = vmatprep.mubr.f32.mxu0 0.0
        %1439 = vmatmul.mubr.f32.gmra.mrb[0].mxu0 %v982
        %v1440 = vpop.f32.mrb[0].mxu0
        %v1441 = vadd.f32 0.0, %v1440
        %v1442 = vpop.f32.mrb[0].mxu0
        %1443 = vmatprep.mubr.f32.mxu0 0.0
        %1444 = vmatmul.mubr.f32.gmra.mrb[0].mxu0 %v983
        %v1445 = vpop.f32.mrb[0].mxu0
        %v1446 = vadd.f32 0.0, %v1445
        %v1447 = vpop.f32.mrb[0].mxu0
        %1448 = vmatprep.mubr.f32.mxu0 0.0
        %1449 = vmatmul.mubr.f32.gmra.mrb[0].mxu0 %v984
        %v1450 = vpop.f32.mrb[0].mxu0
        %v1451 = vadd.f32 0.0, %v1450
        %v1452 = vpop.f32.mrb[0].mxu0
        %1453 = vmatprep.mubr.f32.mxu0 0.0
        %1454 = vmatmul.mubr.f32.gmra.mrb[0].mxu0 %v985
        %v1455 = vpop.f32.mrb[0].mxu0
        %v1456 = vadd.f32 0.0, %v1455
        %v1457 = vpop.f32.mrb[0].mxu0
        %1458 = vmatprep.mubr.f32.mxu0 0.0
        %1459 = vmatmul.mubr.f32.gmra.mrb[0].mxu0 %v986
        %v1460 = vpop.f32.mrb[0].mxu0
        %v1461 = vadd.f32 0.0, %v1460
        %v1462 = vpop.f32.mrb[0].mxu0
        %1463 = vmatprep.mubr.f32.mxu0 0.0
        %1464 = vmatmul.mubr.f32.gmra.mrb[0].mxu0 %v987
        %v1465 = vpop.f32.mrb[0].mxu0
        %v1466 = vadd.f32 0.0, %v1465
        %v1467 = vpop.f32.mrb[0].mxu0
        %1468 = vmatprep.mubr.f32.mxu0 0.0
        %1469 = vmatmul.mubr.f32.gmra.mrb[0].mxu0 %v988
        %v1470 = vpop.f32.mrb[0].mxu0
        %v1471 = vadd.f32 0.0, %v1470
        %v1472 = vpop.f32.mrb[0].mxu0
        %1473 = vmatprep.mubr.f32.mxu0 0.0
        %1474 = vmatmul.mubr.f32.gmra.mrb[0].mxu0 %v989
        %v1475 = vpop.f32.mrb[0].mxu0
        %v1476 = vadd.f32 0.0, %v1475
        %v1477 = vpop.f32.mrb[0].mxu0
        %1478 = vmatprep.mubr.f32.mxu0 0.0
        %1479 = vmatmul.mubr.f32.gmra.mrb[0].mxu0 %v990
        %v1480 = vpop.f32.mrb[0].mxu0
        %v1481 = vadd.f32 0.0, %v1480
        %v1482 = vpop.f32.mrb[0].mxu0
        %1483 = vmatprep.mubr.f32.mxu0 0.0
        %1484 = vmatmul.mubr.f32.gmra.mrb[0].mxu0 %v991
        %v1485 = vpop.f32.mrb[0].mxu0
        %v1486 = vadd.f32 0.0, %v1485
        %v1487 = vpop.f32.mrb[0].mxu0
        %1488 = vmatprep.mubr.f32.mxu0 0.0
        %1489 = vmatmul.mubr.f32.gmra.mrb[0].mxu0 %v992
        %v1490 = vpop.f32.mrb[0].mxu0
        %v1491 = vadd.f32 0.0, %v1490
        %v1492 = vpop.f32.mrb[0].mxu0
        %1493 = vmatprep.mubr.f32.mxu0 0.0
        %1494 = vmatmul.mubr.f32.gmra.mrb[0].mxu0 %v993
        %v1495 = vpop.f32.mrb[0].mxu0
        %v1496 = vadd.f32 0.0, %v1495
        %v1497 = vpop.f32.mrb[0].mxu0
        %1498 = vmatprep.mubr.f32.mxu0 0.0
        %1499 = vmatmul.mubr.f32.gmra.mrb[0].mxu0 %v994
        %v1500 = vpop.f32.mrb[0].mxu0
        %v1501 = vadd.f32 0.0, %v1500
        %v1502 = vpop.f32.mrb[0].mxu0
        %1503 = vmatprep.mubr.f32.mxu0 0.0
        %1504 = vmatmul.mubr.f32.gmra.mrb[0].mxu0 %v995
        %v1505 = vpop.f32.mrb[0].mxu0
        %v1506 = vadd.f32 0.0, %v1505
        %v1507 = vpop.f32.mrb[0].mxu0
        %1508 = vmatprep.mubr.f32.mxu0 0.0
        %1509 = vmatmul.mubr.f32.gmra.mrb[0].mxu0 %v996
        %v1510 = vpop.f32.mrb[0].mxu0
        %v1511 = vadd.f32 0.0, %v1510
        %v1512 = vpop.f32.mrb[0].mxu0
        %1513 = vmatprep.mubr.f32.mxu0 0.0
        %1514 = vmatmul.mubr.f32.gmra.mrb[0].mxu0 %v997
        %v1515 = vpop.f32.mrb[0].mxu0
        %v1516 = vadd.f32 0.0, %v1515
        %v1517 = vpop.f32.mrb[0].mxu0
        %1518 = vmatprep.mubr.f32.mxu0 0.0
        %1519 = vmatmul.mubr.f32.gmra.mrb[0].mxu0 %v998
        %v1520 = vpop.f32.mrb[0].mxu0
        %v1521 = vadd.f32 0.0, %v1520
        %v1522 = vpop.f32.mrb[0].mxu0
        %1523 = vmatprep.mubr.f32.mxu0 0.0
        %1524 = vmatmul.mubr.f32.gmra.mrb[0].mxu0 %v999
        %v1525 = vpop.f32.mrb[0].mxu0
        %v1526 = vadd.f32 0.0, %v1525
        %v1527 = vpop.f32.mrb[0].mxu0
        %1528 = vmatprep.mubr.f32.mxu0 0.0
        %1529 = vmatmul.mubr.f32.gmra.mrb[0].mxu0 %v1000
        %v1530 = vpop.f32.mrb[0].mxu0
        %v1531 = vadd.f32 0.0, %v1530
        %v1532 = vpop.f32.mrb[0].mxu0
        %1533 = vmatprep.mubr.f32.mxu0 0.0
        %1534 = vmatmul.mubr.f32.gmra.mrb[0].mxu0 %v1001
        %v1535 = vpop.f32.mrb[0].mxu0
        %v1536 = vadd.f32 0.0, %v1535
        %v1537 = vpop.f32.mrb[0].mxu0
        %1538 = vmatprep.mubr.f32.mxu0 0.0
        %1539 = vmatmul.mubr.f32.gmra.mrb[0].mxu0 %v1002
        %v1540 = vpop.f32.mrb[0].mxu0
        %v1541 = vadd.f32 0.0, %v1540
        %v1542 = vpop.f32.mrb[0].mxu0
        %1543 = vmatprep.mubr.f32.mxu0 0.0
        %1544 = vmatmul.mubr.f32.gmra.mrb[0].mxu0 %v1003
        %v1545 = vpop.f32.mrb[0].mxu0
        %v1546 = vadd.f32 0.0, %v1545
        %v1547 = vpop.f32.mrb[0].mxu0
        %1548 = vmatprep.mubr.f32.mxu0 0.0
        %1549 = vmatmul.mubr.f32.gmra.mrb[0].mxu0 %v1004
        %v1550 = vpop.f32.mrb[0].mxu0
        %v1551 = vadd.f32 0.0, %v1550
        %v1552 = vpop.f32.mrb[0].mxu0
        %1553 = vmatprep.mubr.f32.mxu0 0.0
        %1554 = vmatmul.mubr.f32.gmra.mrb[0].mxu0 %v1005
        %v1555 = vpop.f32.mrb[0].mxu0
        %v1556 = vadd.f32 0.0, %v1555
        %v1557 = vpop.f32.mrb[0].mxu0
        %1558 = vmatprep.mubr.f32.mxu0 0.0
        %1559 = vmatmul.mubr.f32.gmra.mrb[0].mxu0 %v1006
        %v1560 = vpop.f32.mrb[0].mxu0
        %v1561 = vadd.f32 0.0, %v1560
        %v1562 = vpop.f32.mrb[0].mxu0
        %1563 = vmatprep.mubr.f32.mxu0 0.0
        %1564 = vmatmul.mubr.f32.gmra.mrb[0].mxu0 %v1007
        %v1565 = vpop.f32.mrb[0].mxu0
        %v1566 = vadd.f32 0.0, %v1565
        %v1567 = vpop.f32.mrb[0].mxu0
        %1568 = vdwg.mxu0
        %v1569 = vld [vmem:[%s4] sm:$0x1]
        %v1570 = vld [vmem:[#allocation2] sm:$0x1]
        %v1571 = vadd.f32 %v753, %v1091
        %v1572 = vadd.f32 %v758, %v1096
        %v1573 = vadd.f32 %v763, %v1101
        %v1574 = vadd.f32 %v768, %v1106
        %v1575 = vadd.f32 %v773, %v1111
        %v1576 = vadd.f32 %v778, %v1116
        %v1577 = vadd.f32 %v783, %v1121
        %v1578 = vadd.f32 %v788, %v1126
        %v1579 = vadd.f32 %v793, %v1131
        %v1580 = vadd.f32 %v798, %v1136
        %v1581 = vadd.f32 %v803, %v1141
        %v1582 = vadd.f32 %v808, %v1146
        %v1583 = vadd.f32 %v813, %v1151
        %v1584 = vadd.f32 %v818, %v1156
        %v1585 = vadd.f32 %v823, %v1161
        %v1586 = vadd.f32 %v828, %v1166
        %v1587 = vadd.f32 %v833, %v1171
        %v1588 = vadd.f32 %v838, %v1176
        %v1589 = vadd.f32 %v843, %v1181
        %v1590 = vadd.f32 %v848, %v1186
        %v1591 = vadd.f32 %v853, %v1191
        %v1592 = vadd.f32 %v858, %v1196
        %v1593 = vadd.f32 %v863, %v1201
        %v1594 = vadd.f32 %v868, %v1206
        %v1595 = vadd.f32 %v873, %v1211
        %v1596 = vadd.f32 %v878, %v1216
        %v1597 = vadd.f32 %v883, %v1221
        %v1598 = vadd.f32 %v888, %v1226
        %v1599 = vadd.f32 %v893, %v1231
        %v1600 = vadd.f32 %v898, %v1236
        %v1601 = vadd.f32 %v903, %v1241
        %v1602 = vadd.f32 %v908, %v1246
        %v1603 = vmax.f32 %v1571, 0.0
        %v1604 = vmax.f32 %v1572, 0.0
        %v1605 = vmax.f32 %v1573, 0.0
        %v1606 = vmax.f32 %v1574, 0.0
        %v1607 = vmax.f32 %v1575, 0.0
        %v1608 = vmax.f32 %v1576, 0.0
        %v1609 = vmax.f32 %v1577, 0.0
        %v1610 = vmax.f32 %v1578, 0.0
        %v1611 = vmax.f32 %v1579, 0.0
        %v1612 = vmax.f32 %v1580, 0.0
        %v1613 = vmax.f32 %v1581, 0.0
        %v1614 = vmax.f32 %v1582, 0.0
        %v1615 = vmax.f32 %v1583, 0.0
        %v1616 = vmax.f32 %v1584, 0.0
        %v1617 = vmax.f32 %v1585, 0.0
        %v1618 = vmax.f32 %v1586, 0.0
        %v1619 = vmax.f32 %v1587, 0.0
        %v1620 = vmax.f32 %v1588, 0.0
        %v1621 = vmax.f32 %v1589, 0.0
        %v1622 = vmax.f32 %v1590, 0.0
        %v1623 = vmax.f32 %v1591, 0.0
        %v1624 = vmax.f32 %v1592, 0.0
        %v1625 = vmax.f32 %v1593, 0.0
        %v1626 = vmax.f32 %v1594, 0.0
        %v1627 = vmax.f32 %v1595, 0.0
        %v1628 = vmax.f32 %v1596, 0.0
        %v1629 = vmax.f32 %v1597, 0.0
        %v1630 = vmax.f32 %v1598, 0.0
        %v1631 = vmax.f32 %v1599, 0.0
        %v1632 = vmax.f32 %v1600, 0.0
        %v1633 = vmax.f32 %v1601, 0.0
        %v1634 = vmax.f32 %v1602, 0.0
        %1636 = vset.pattern.permute.xlu0 0
        %1637 = vperm.xlu0 %1636, %v1570
        %v1638 = vpop.permute.xlu0 %1637
        %v1640 = vlaneseq
        %v1641 = vshrl.u32 %v1640, 7
        %v1642 = vsub.s32 0, %v1641
        %v1643 = vrot.slane %v1638, %v1642
        %1644 = vmatprep.subr.mxu0 0.0
        %1645 = vmatpush1.xpose.msra.mxu0 %v1603
        %1646 = vmatprep.subr.mxu0 0.0
        %1647 = vmatpush1.xpose.msra.mxu0 %v1604
        %1648 = vmatprep.subr.mxu0 0.0
        %1649 = vmatpush1.xpose.msra.mxu0 %v1605
        %1650 = vmatprep.subr.mxu0 0.0
        %1651 = vmatpush1.xpose.msra.mxu0 %v1606
        %1652 = vmatprep.subr.mxu0 0.0
        %1653 = vmatpush1.xpose.msra.mxu0 %v1607
        %1654 = vmatprep.subr.mxu0 0.0
        %1655 = vmatpush1.xpose.msra.mxu0 %v1608
        %1656 = vmatprep.subr.mxu0 0.0
        %1657 = vmatpush1.xpose.msra.mxu0 %v1609
        %1658 = vmatprep.subr.mxu0 0.0
        %1659 = vmatpush1.xpose.msra.mxu0 %v1610
        %1660 = vmatprep.subr.mxu0 0.0
        %1661 = vmatpush1.xpose.msra.mxu0 %v1611
        %1662 = vmatprep.subr.mxu0 0.0
        %1663 = vmatpush1.xpose.msra.mxu0 %v1612
        %1664 = vmatprep.subr.mxu0 0.0
        %1665 = vmatpush1.xpose.msra.mxu0 %v1613
        %1666 = vmatprep.subr.mxu0 0.0
        %1667 = vmatpush1.xpose.msra.mxu0 %v1614
        %1668 = vmatprep.subr.mxu0 0.0
        %1669 = vmatpush1.xpose.msra.mxu0 %v1615
        %1670 = vmatprep.subr.mxu0 0.0
        %1671 = vmatpush1.xpose.msra.mxu0 %v1616
        %1672 = vmatprep.subr.mxu0 0.0
        %1673 = vmatpush1.xpose.msra.mxu0 %v1617
        %1674 = vmatprep.subr.mxu0 0.0
        %1675 = vmatpush1.xpose.msra.mxu0 %v1618
        %1676 = vmatprep.subr.mxu0 0.0
        %1677 = vmatpush1.xpose.msra.mxu0 %v1619
        %1678 = vmatprep.subr.mxu0 0.0
        %1679 = vmatpush1.xpose.msra.mxu0 %v1620
        %1680 = vmatprep.subr.mxu0 0.0
        %1681 = vmatpush1.xpose.msra.mxu0 %v1621
        %1682 = vmatprep.subr.mxu0 0.0
        %1683 = vmatpush1.xpose.msra.mxu0 %v1622
        %1684 = vmatprep.subr.mxu0 0.0
        %1685 = vmatpush1.xpose.msra.mxu0 %v1623
        %1686 = vmatprep.subr.mxu0 0.0
        %1687 = vmatpush1.xpose.msra.mxu0 %v1624
        %1688 = vmatprep.subr.mxu0 0.0
        %1689 = vmatpush1.xpose.msra.mxu0 %v1625
        %1690 = vmatprep.subr.mxu0 0.0
        %1691 = vmatpush1.xpose.msra.mxu0 %v1626
        %1692 = vmatprep.subr.mxu0 0.0
        %1693 = vmatpush1.xpose.msra.mxu0 %v1627
        %1694 = vmatprep.subr.mxu0 0.0
        %1695 = vmatpush1.xpose.msra.mxu0 %v1628
        %1696 = vmatprep.subr.mxu0 0.0
        %1697 = vmatpush1.xpose.msra.mxu0 %v1629
        %1698 = vmatprep.subr.mxu0 0.0
        %1699 = vmatpush1.xpose.msra.mxu0 %v1630
        %1700 = vmatprep.subr.mxu0 0.0
        %1701 = vmatpush1.xpose.msra.mxu0 %v1631
        %1702 = vmatprep.subr.mxu0 0.0
        %1703 = vmatpush1.xpose.msra.mxu0 %v1632
        %1704 = vmatprep.subr.mxu0 0.0
        %1705 = vmatpush1.xpose.msra.mxu0 %v1633
        %1706 = vmatprep.subr.mxu0 0.0
        %1707 = vmatpush1.xpose.msra.mxu0 %v1634
        %1708 = vmatprep.mubr.f32.mxu0 0.0
        %1709 = vmatmul.mubr.f32.gmra.mrb[0].mxu0 %v1569
        %v1710 = vpop.f32.mrb[0].mxu0
        %v1711 = vadd.f32 %v1643, %v1710
        %v1712 = vpop.f32.mrb[0].mxu0
        %v1713 = vadd.f32 %v1643, %v1712
        %1714 = vdwg.mxu0
        %v1715 = vadd.f32 %v753, %v1251
        %v1716 = vadd.f32 %v758, %v1256
        %v1717 = vadd.f32 %v763, %v1261
        %v1718 = vadd.f32 %v768, %v1266
        %v1719 = vadd.f32 %v773, %v1271
        %v1720 = vadd.f32 %v778, %v1276
        %v1721 = vadd.f32 %v783, %v1281
        %v1722 = vadd.f32 %v788, %v1286
        %v1723 = vadd.f32 %v793, %v1291
        %v1724 = vadd.f32 %v798, %v1296
        %v1725 = vadd.f32 %v803, %v1301
        %v1726 = vadd.f32 %v808, %v1306
        %v1727 = vadd.f32 %v813, %v1311
        %v1728 = vadd.f32 %v818, %v1316
        %v1729 = vadd.f32 %v823, %v1321
        %v1730 = vadd.f32 %v828, %v1326
        %v1731 = vadd.f32 %v833, %v1331
        %v1732 = vadd.f32 %v838, %v1336
        %v1733 = vadd.f32 %v843, %v1341
        %v1734 = vadd.f32 %v848, %v1346
        %v1735 = vadd.f32 %v853, %v1351
        %v1736 = vadd.f32 %v858, %v1356
        %v1737 = vadd.f32 %v863, %v1361
        %v1738 = vadd.f32 %v868, %v1366
        %v1739 = vadd.f32 %v873, %v1371
        %v1740 = vadd.f32 %v878, %v1376
        %v1741 = vadd.f32 %v883, %v1381
        %v1742 = vadd.f32 %v888, %v1386
        %v1743 = vadd.f32 %v893, %v1391
        %v1744 = vadd.f32 %v898, %v1396
        %v1745 = vadd.f32 %v903, %v1401
        %v1746 = vadd.f32 %v908, %v1406
        %v1747 = vmax.f32 %v1715, 0.0
        %v1748 = vmax.f32 %v1716, 0.0
        %v1749 = vmax.f32 %v1717, 0.0
        %v1750 = vmax.f32 %v1718, 0.0
        %v1751 = vmax.f32 %v1719, 0.0
        %v1752 = vmax.f32 %v1720, 0.0
        %v1753 = vmax.f32 %v1721, 0.0
        %v1754 = vmax.f32 %v1722, 0.0
        %v1755 = vmax.f32 %v1723, 0.0
        %v1756 = vmax.f32 %v1724, 0.0
        %v1757 = vmax.f32 %v1725, 0.0
        %v1758 = vmax.f32 %v1726, 0.0
        %v1759 = vmax.f32 %v1727, 0.0
        %v1760 = vmax.f32 %v1728, 0.0
        %v1761 = vmax.f32 %v1729, 0.0
        %v1762 = vmax.f32 %v1730, 0.0
        %v1763 = vmax.f32 %v1731, 0.0
        %v1764 = vmax.f32 %v1732, 0.0
        %v1765 = vmax.f32 %v1733, 0.0
        %v1766 = vmax.f32 %v1734, 0.0
        %v1767 = vmax.f32 %v1735, 0.0
        %v1768 = vmax.f32 %v1736, 0.0
        %v1769 = vmax.f32 %v1737, 0.0
        %v1770 = vmax.f32 %v1738, 0.0
        %v1771 = vmax.f32 %v1739, 0.0
        %v1772 = vmax.f32 %v1740, 0.0
        %v1773 = vmax.f32 %v1741, 0.0
        %v1774 = vmax.f32 %v1742, 0.0
        %v1775 = vmax.f32 %v1743, 0.0
        %v1776 = vmax.f32 %v1744, 0.0
        %v1777 = vmax.f32 %v1745, 0.0
        %v1778 = vmax.f32 %v1746, 0.0
        %1779 = vmatprep.subr.mxu0 0.0
        %1780 = vmatpush1.xpose.msra.mxu0 %v1747
        %1781 = vmatprep.subr.mxu0 0.0
        %1782 = vmatpush1.xpose.msra.mxu0 %v1748
        %1783 = vmatprep.subr.mxu0 0.0
        %1784 = vmatpush1.xpose.msra.mxu0 %v1749
        %1785 = vmatprep.subr.mxu0 0.0
        %1786 = vmatpush1.xpose.msra.mxu0 %v1750
        %1787 = vmatprep.subr.mxu0 0.0
        %1788 = vmatpush1.xpose.msra.mxu0 %v1751
        %1789 = vmatprep.subr.mxu0 0.0
        %1790 = vmatpush1.xpose.msra.mxu0 %v1752
        %1791 = vmatprep.subr.mxu0 0.0
        %1792 = vmatpush1.xpose.msra.mxu0 %v1753
        %1793 = vmatprep.subr.mxu0 0.0
        %1794 = vmatpush1.xpose.msra.mxu0 %v1754
        %1795 = vmatprep.subr.mxu0 0.0
        %1796 = vmatpush1.xpose.msra.mxu0 %v1755
        %1797 = vmatprep.subr.mxu0 0.0
        %1798 = vmatpush1.xpose.msra.mxu0 %v1756
        %1799 = vmatprep.subr.mxu0 0.0
        %1800 = vmatpush1.xpose.msra.mxu0 %v1757
        %1801 = vmatprep.subr.mxu0 0.0
        %1802 = vmatpush1.xpose.msra.mxu0 %v1758
        %1803 = vmatprep.subr.mxu0 0.0
        %1804 = vmatpush1.xpose.msra.mxu0 %v1759
        %1805 = vmatprep.subr.mxu0 0.0
        %1806 = vmatpush1.xpose.msra.mxu0 %v1760
        %1807 = vmatprep.subr.mxu0 0.0
        %1808 = vmatpush1.xpose.msra.mxu0 %v1761
        %1809 = vmatprep.subr.mxu0 0.0
        %1810 = vmatpush1.xpose.msra.mxu0 %v1762
        %1811 = vmatprep.subr.mxu0 0.0
        %1812 = vmatpush1.xpose.msra.mxu0 %v1763
        %1813 = vmatprep.subr.mxu0 0.0
        %1814 = vmatpush1.xpose.msra.mxu0 %v1764
        %1815 = vmatprep.subr.mxu0 0.0
        %1816 = vmatpush1.xpose.msra.mxu0 %v1765
        %1817 = vmatprep.subr.mxu0 0.0
        %1818 = vmatpush1.xpose.msra.mxu0 %v1766
        %1819 = vmatprep.subr.mxu0 0.0
        %1820 = vmatpush1.xpose.msra.mxu0 %v1767
        %1821 = vmatprep.subr.mxu0 0.0
        %1822 = vmatpush1.xpose.msra.mxu0 %v1768
        %1823 = vmatprep.subr.mxu0 0.0
        %1824 = vmatpush1.xpose.msra.mxu0 %v1769
        %1825 = vmatprep.subr.mxu0 0.0
        %1826 = vmatpush1.xpose.msra.mxu0 %v1770
        %1827 = vmatprep.subr.mxu0 0.0
        %1828 = vmatpush1.xpose.msra.mxu0 %v1771
        %1829 = vmatprep.subr.mxu0 0.0
        %1830 = vmatpush1.xpose.msra.mxu0 %v1772
        %1831 = vmatprep.subr.mxu0 0.0
        %1832 = vmatpush1.xpose.msra.mxu0 %v1773
        %1833 = vmatprep.subr.mxu0 0.0
        %1834 = vmatpush1.xpose.msra.mxu0 %v1774
        %1835 = vmatprep.subr.mxu0 0.0
        %1836 = vmatpush1.xpose.msra.mxu0 %v1775
        %1837 = vmatprep.subr.mxu0 0.0
        %1838 = vmatpush1.xpose.msra.mxu0 %v1776
        %1839 = vmatprep.subr.mxu0 0.0
        %1840 = vmatpush1.xpose.msra.mxu0 %v1777
        %1841 = vmatprep.subr.mxu0 0.0
        %1842 = vmatpush1.xpose.msra.mxu0 %v1778
        %1843 = vmatprep.mubr.f32.mxu0 0.0
        %1844 = vmatmul.mubr.f32.gmra.mrb[0].mxu0 %v1569
        %v1845 = vpop.f32.mrb[0].mxu0
        %v1846 = vadd.f32 %v1643, %v1845
        %v1847 = vpop.f32.mrb[0].mxu0
        %v1848 = vadd.f32 %v1643, %v1847
        %1849 = vdwg.mxu0
        %v1850 = vadd.f32 %v753, %v1411
        %v1851 = vadd.f32 %v758, %v1416
        %v1852 = vadd.f32 %v763, %v1421
        %v1853 = vadd.f32 %v768, %v1426
        %v1854 = vadd.f32 %v773, %v1431
        %v1855 = vadd.f32 %v778, %v1436
        %v1856 = vadd.f32 %v783, %v1441
        %v1857 = vadd.f32 %v788, %v1446
        %v1858 = vadd.f32 %v793, %v1451
        %v1859 = vadd.f32 %v798, %v1456
        %v1860 = vadd.f32 %v803, %v1461
        %v1861 = vadd.f32 %v808, %v1466
        %v1862 = vadd.f32 %v813, %v1471
        %v1863 = vadd.f32 %v818, %v1476
        %v1864 = vadd.f32 %v823, %v1481
        %v1865 = vadd.f32 %v828, %v1486
        %v1866 = vadd.f32 %v833, %v1491
        %v1867 = vadd.f32 %v838, %v1496
        %v1868 = vadd.f32 %v843, %v1501
        %v1869 = vadd.f32 %v848, %v1506
        %v1870 = vadd.f32 %v853, %v1511
        %v1871 = vadd.f32 %v858, %v1516
        %v1872 = vadd.f32 %v863, %v1521
        %v1873 = vadd.f32 %v868, %v1526
        %v1874 = vadd.f32 %v873, %v1531
        %v1875 = vadd.f32 %v878, %v1536
        %v1876 = vadd.f32 %v883, %v1541
        %v1877 = vadd.f32 %v888, %v1546
        %v1878 = vadd.f32 %v893, %v1551
        %v1879 = vadd.f32 %v898, %v1556
        %v1880 = vadd.f32 %v903, %v1561
        %v1881 = vadd.f32 %v908, %v1566
        %v1882 = vmax.f32 %v1850, 0.0
        %v1883 = vmax.f32 %v1851, 0.0
        %v1884 = vmax.f32 %v1852, 0.0
        %v1885 = vmax.f32 %v1853, 0.0
        %v1886 = vmax.f32 %v1854, 0.0
        %v1887 = vmax.f32 %v1855, 0.0
        %v1888 = vmax.f32 %v1856, 0.0
        %v1889 = vmax.f32 %v1857, 0.0
        %v1890 = vmax.f32 %v1858, 0.0
        %v1891 = vmax.f32 %v1859, 0.0
        %v1892 = vmax.f32 %v1860, 0.0
        %v1893 = vmax.f32 %v1861, 0.0
        %v1894 = vmax.f32 %v1862, 0.0
        %v1895 = vmax.f32 %v1863, 0.0
        %v1896 = vmax.f32 %v1864, 0.0
        %v1897 = vmax.f32 %v1865, 0.0
        %v1898 = vmax.f32 %v1866, 0.0
        %v1899 = vmax.f32 %v1867, 0.0
        %v1900 = vmax.f32 %v1868, 0.0
        %v1901 = vmax.f32 %v1869, 0.0
        %v1902 = vmax.f32 %v1870, 0.0
        %v1903 = vmax.f32 %v1871, 0.0
        %v1904 = vmax.f32 %v1872, 0.0
        %v1905 = vmax.f32 %v1873, 0.0
        %v1906 = vmax.f32 %v1874, 0.0
        %v1907 = vmax.f32 %v1875, 0.0
        %v1908 = vmax.f32 %v1876, 0.0
        %v1909 = vmax.f32 %v1877, 0.0
        %v1910 = vmax.f32 %v1878, 0.0
        %v1911 = vmax.f32 %v1879, 0.0
        %v1912 = vmax.f32 %v1880, 0.0
        %v1913 = vmax.f32 %v1881, 0.0
        %1914 = vmatprep.subr.mxu0 0.0
        %1915 = vmatpush1.xpose.msra.mxu0 %v1882
        %1916 = vmatprep.subr.mxu0 0.0
        %1917 = vmatpush1.xpose.msra.mxu0 %v1883
        %1918 = vmatprep.subr.mxu0 0.0
        %1919 = vmatpush1.xpose.msra.mxu0 %v1884
        %1920 = vmatprep.subr.mxu0 0.0
        %1921 = vmatpush1.xpose.msra.mxu0 %v1885
        %1922 = vmatprep.subr.mxu0 0.0
        %1923 = vmatpush1.xpose.msra.mxu0 %v1886
        %1924 = vmatprep.subr.mxu0 0.0
        %1925 = vmatpush1.xpose.msra.mxu0 %v1887
        %1926 = vmatprep.subr.mxu0 0.0
        %1927 = vmatpush1.xpose.msra.mxu0 %v1888
        %1928 = vmatprep.subr.mxu0 0.0
        %1929 = vmatpush1.xpose.msra.mxu0 %v1889
        %1930 = vmatprep.subr.mxu0 0.0
        %1931 = vmatpush1.xpose.msra.mxu0 %v1890
        %1932 = vmatprep.subr.mxu0 0.0
        %1933 = vmatpush1.xpose.msra.mxu0 %v1891
        %1934 = vmatprep.subr.mxu0 0.0
        %1935 = vmatpush1.xpose.msra.mxu0 %v1892
        %1936 = vmatprep.subr.mxu0 0.0
        %1937 = vmatpush1.xpose.msra.mxu0 %v1893
        %1938 = vmatprep.subr.mxu0 0.0
        %1939 = vmatpush1.xpose.msra.mxu0 %v1894
        %1940 = vmatprep.subr.mxu0 0.0
        %1941 = vmatpush1.xpose.msra.mxu0 %v1895
        %1942 = vmatprep.subr.mxu0 0.0
        %1943 = vmatpush1.xpose.msra.mxu0 %v1896
        %1944 = vmatprep.subr.mxu0 0.0
        %1945 = vmatpush1.xpose.msra.mxu0 %v1897
        %1946 = vmatprep.subr.mxu0 0.0
        %1947 = vmatpush1.xpose.msra.mxu0 %v1898
        %1948 = vmatprep.subr.mxu0 0.0
        %1949 = vmatpush1.xpose.msra.mxu0 %v1899
        %1950 = vmatprep.subr.mxu0 0.0
        %1951 = vmatpush1.xpose.msra.mxu0 %v1900
        %1952 = vmatprep.subr.mxu0 0.0
        %1953 = vmatpush1.xpose.msra.mxu0 %v1901
        %1954 = vmatprep.subr.mxu0 0.0
        %1955 = vmatpush1.xpose.msra.mxu0 %v1902
        %1956 = vmatprep.subr.mxu0 0.0
        %1957 = vmatpush1.xpose.msra.mxu0 %v1903
        %1958 = vmatprep.subr.mxu0 0.0
        %1959 = vmatpush1.xpose.msra.mxu0 %v1904
        %1960 = vmatprep.subr.mxu0 0.0
        %1961 = vmatpush1.xpose.msra.mxu0 %v1905
        %1962 = vmatprep.subr.mxu0 0.0
        %1963 = vmatpush1.xpose.msra.mxu0 %v1906
        %1964 = vmatprep.subr.mxu0 0.0
        %1965 = vmatpush1.xpose.msra.mxu0 %v1907
        %1966 = vmatprep.subr.mxu0 0.0
        %1967 = vmatpush1.xpose.msra.mxu0 %v1908
        %1968 = vmatprep.subr.mxu0 0.0
        %1969 = vmatpush1.xpose.msra.mxu0 %v1909
        %1970 = vmatprep.subr.mxu0 0.0
        %1971 = vmatpush1.xpose.msra.mxu0 %v1910
        %1972 = vmatprep.subr.mxu0 0.0
        %1973 = vmatpush1.xpose.msra.mxu0 %v1911
        %1974 = vmatprep.subr.mxu0 0.0
        %1975 = vmatpush1.xpose.msra.mxu0 %v1912
        %1976 = vmatprep.subr.mxu0 0.0
        %1977 = vmatpush1.xpose.msra.mxu0 %v1913
        %1978 = vmatprep.mubr.f32.mxu0 0.0
        %1979 = vmatmul.mubr.f32.gmra.mrb[0].mxu0 %v1569
        %v1980 = vpop.f32.mrb[0].mxu0
        %v1981 = vadd.f32 %v1643, %v1980
        %v1982 = vpop.f32.mrb[0].mxu0
        %v1983 = vadd.f32 %v1643, %v1982
        %1984 = vdwg.mxu0
        %v1987 = vrot.slane %v1846, 7
        %v1988 = vrot.slane %v1848, 7
        %v1993 = vrot.slane %v1981, 6
        %v1994 = vrot.slane %v1983, 6
        %vm1997 = vcmask 1040384
        %v1998 = vsel %vm1997, %v1711, %v1987
        %v1999 = vsel %vm1997, %v1713, %v1988
        %vm2000 = vcmask 1041408
        %v2001 = vsel %vm2000, %v1998, %v1993
        %v2002 = vsel %vm2000, %v1999, %v1994
        %v2005 = vcombine.low %v2001, %v2002
        %2007 = vst [vmem:[%s620] sm:$0x77] %v2005
        %s2008 = sand.u32 %s158, 1
        %s2009 = sand.u32 %s158, 1
        %s2010 = smul.addr %s2009, 8
        %s2011 = scalar_lea.vmem [#allocation4], %s2010
        // Predicated region
        $region97: #{edge_predictor_forward.1} parent=91 // pred_check
          %p2012 = pneg %p168
        $region98: #{edge_predictor_forward.1} parent=91 // pred_check_branch
          %2014 = sbr.rel (%p2012) target = $region100
        $region99: #{edge_predictor_forward.1} parent=91 // pred_region
          %s2015 = smul.u32 2, %s19
          %s2016 = ssub.s32 3, %s2015
          %p2017 = scmp.lt.s32.totalorder %s2016, 2
          %s2018 = scalar_select %p2017, %s2016, 2
          %s2019 = smul.u32 64, %s2018
          %p2020 = scmp.ne.s32.totalorder 0, %s2019
          %s2021 = smul.addr %s2015, 4
          %s2022 = scalar_lea.vmem %s6, %s2021
          %s2023 = smul.u32 %s2018, 4
          // Predicated region
          $region101: #{edge_predictor_forward.1} parent=99 // pred_check
            %p2024 = pneg %p2020
          $region102: #{edge_predictor_forward.1} parent=99 // pred_check_branch
            %2026 = sbr.rel (%p2024) target = $region104
          $region103: #{edge_predictor_forward.1} parent=99 // pred_region
            %p2027 = scmp.lt.u32.totalorder %s2023, 8
            %p2028 = pneg %p2027
            // Predicated region
            $region105: #{edge_predictor_forward.1} parent=103 // pred_check
              _
            $region106: #{edge_predictor_forward.1} parent=103 // pred_check_branch
              %2030 = sbr.rel (%p2027) target = $region108
            $region107: #{edge_predictor_forward.1} parent=103 // pred_region
              %s2045 = sand.u32 %s2023, 7
              %p2046 = scmp.eq.s32.totalorder %s2045, 0
              // Predicated region
              $region120: #{edge_predictor_forward.1} parent=107 // pred_check
                %p2047 = pneg %p2046
              $region121: #{edge_predictor_forward.1} parent=107 // pred_check_branch
                %2049 = sbr.rel (%p2047) target = $region123
              $region122: #{edge_predictor_forward.1} parent=107 // pred_region
                %s2050 = sshrl.u32 %s2023, 3
                %s2051 = sshrl.u32 %s2050, 6
                // While loop
                $region124: #{edge_predictor_forward.1} parent=122 // loop_pre_header
                  _
                $region125: #{edge_predictor_forward.1} parent=122 // loop_header
                  %s2055 = sphi 0, %s2057
                  %p2056 = scmp.ge.s32.totalorder %s2055, %s2051
                  %s2060 = sphi 0, %s2193
                  %s2061 = sphi %s2011, %s2196
                  %s2062 = sphi %s2022, %s2197
                $region126: #{edge_predictor_forward.1} parent=122 // loop_header_branch
                  %2059 = sbr.rel (%p2056) target = $region130
                $region127: #{edge_predictor_forward.1} parent=122 // loop_body
                  %v2063 = vld [vmem:[%s2061] sm:$0xff]
                  %2064 = vst [vmem:[%s2062] sm:$0xff] %v2063
                  %v2065 = vld [vmem:[%s2061 + $0x8] sm:$0xff]
                  %2066 = vst [vmem:[%s2062 + $0x8] sm:$0xff] %v2065
                  %v2067 = vld [vmem:[%s2061 + $0x10] sm:$0xff]
                  %2068 = vst [vmem:[%s2062 + $0x10] sm:$0xff] %v2067
                  %v2069 = vld [vmem:[%s2061 + $0x18] sm:$0xff]
                  %2070 = vst [vmem:[%s2062 + $0x18] sm:$0xff] %v2069
                  %v2071 = vld [vmem:[%s2061 + $0x20] sm:$0xff]
                  %2072 = vst [vmem:[%s2062 + $0x20] sm:$0xff] %v2071
                  %v2073 = vld [vmem:[%s2061 + $0x28] sm:$0xff]
                  %2074 = vst [vmem:[%s2062 + $0x28] sm:$0xff] %v2073
                  %v2075 = vld [vmem:[%s2061 + $0x30] sm:$0xff]
                  %2076 = vst [vmem:[%s2062 + $0x30] sm:$0xff] %v2075
                  %v2077 = vld [vmem:[%s2061 + $0x38] sm:$0xff]
                  %2078 = vst [vmem:[%s2062 + $0x38] sm:$0xff] %v2077
                  %v2079 = vld [vmem:[%s2061 + $0x40] sm:$0xff]
                  %2080 = vst [vmem:[%s2062 + $0x40] sm:$0xff] %v2079
                  %v2081 = vld [vmem:[%s2061 + $0x48] sm:$0xff]
                  %2082 = vst [vmem:[%s2062 + $0x48] sm:$0xff] %v2081
                  %v2083 = vld [vmem:[%s2061 + $0x50] sm:$0xff]
                  %2084 = vst [vmem:[%s2062 + $0x50] sm:$0xff] %v2083
                  %v2085 = vld [vmem:[%s2061 + $0x58] sm:$0xff]
                  %2086 = vst [vmem:[%s2062 + $0x58] sm:$0xff] %v2085
                  %v2087 = vld [vmem:[%s2061 + $0x60] sm:$0xff]
                  %2088 = vst [vmem:[%s2062 + $0x60] sm:$0xff] %v2087
                  %v2089 = vld [vmem:[%s2061 + $0x68] sm:$0xff]
                  %2090 = vst [vmem:[%s2062 + $0x68] sm:$0xff] %v2089
                  %v2091 = vld [vmem:[%s2061 + $0x70] sm:$0xff]
                  %2092 = vst [vmem:[%s2062 + $0x70] sm:$0xff] %v2091
                  %v2093 = vld [vmem:[%s2061 + $0x78] sm:$0xff]
                  %2094 = vst [vmem:[%s2062 + $0x78] sm:$0xff] %v2093
                  %v2095 = vld [vmem:[%s2061 + $0x80] sm:$0xff]
                  %2096 = vst [vmem:[%s2062 + $0x80] sm:$0xff] %v2095
                  %v2097 = vld [vmem:[%s2061 + $0x88] sm:$0xff]
                  %2098 = vst [vmem:[%s2062 + $0x88] sm:$0xff] %v2097
                  %v2099 = vld [vmem:[%s2061 + $0x90] sm:$0xff]
                  %2100 = vst [vmem:[%s2062 + $0x90] sm:$0xff] %v2099
                  %v2101 = vld [vmem:[%s2061 + $0x98] sm:$0xff]
                  %2102 = vst [vmem:[%s2062 + $0x98] sm:$0xff] %v2101
                  %v2103 = vld [vmem:[%s2061 + $0xa0] sm:$0xff]
                  %2104 = vst [vmem:[%s2062 + $0xa0] sm:$0xff] %v2103
                  %v2105 = vld [vmem:[%s2061 + $0xa8] sm:$0xff]
                  %2106 = vst [vmem:[%s2062 + $0xa8] sm:$0xff] %v2105
                  %v2107 = vld [vmem:[%s2061 + $0xb0] sm:$0xff]
                  %2108 = vst [vmem:[%s2062 + $0xb0] sm:$0xff] %v2107
                  %v2109 = vld [vmem:[%s2061 + $0xb8] sm:$0xff]
                  %2110 = vst [vmem:[%s2062 + $0xb8] sm:$0xff] %v2109
                  %v2111 = vld [vmem:[%s2061 + $0xc0] sm:$0xff]
                  %2112 = vst [vmem:[%s2062 + $0xc0] sm:$0xff] %v2111
                  %v2113 = vld [vmem:[%s2061 + $0xc8] sm:$0xff]
                  %2114 = vst [vmem:[%s2062 + $0xc8] sm:$0xff] %v2113
                  %v2115 = vld [vmem:[%s2061 + $0xd0] sm:$0xff]
                  %2116 = vst [vmem:[%s2062 + $0xd0] sm:$0xff] %v2115
                  %v2117 = vld [vmem:[%s2061 + $0xd8] sm:$0xff]
                  %2118 = vst [vmem:[%s2062 + $0xd8] sm:$0xff] %v2117
                  %v2119 = vld [vmem:[%s2061 + $0xe0] sm:$0xff]
                  %2120 = vst [vmem:[%s2062 + $0xe0] sm:$0xff] %v2119
                  %v2121 = vld [vmem:[%s2061 + $0xe8] sm:$0xff]
                  %2122 = vst [vmem:[%s2062 + $0xe8] sm:$0xff] %v2121
                  %v2123 = vld [vmem:[%s2061 + $0xf0] sm:$0xff]
                  %2124 = vst [vmem:[%s2062 + $0xf0] sm:$0xff] %v2123
                  %v2125 = vld [vmem:[%s2061 + $0xf8] sm:$0xff]
                  %2126 = vst [vmem:[%s2062 + $0xf8] sm:$0xff] %v2125
                  %v2127 = vld [vmem:[%s2061 + $0x100] sm:$0xff]
                  %2128 = vst [vmem:[%s2062 + $0x100] sm:$0xff] %v2127
                  %v2129 = vld [vmem:[%s2061 + $0x108] sm:$0xff]
                  %2130 = vst [vmem:[%s2062 + $0x108] sm:$0xff] %v2129
                  %v2131 = vld [vmem:[%s2061 + $0x110] sm:$0xff]
                  %2132 = vst [vmem:[%s2062 + $0x110] sm:$0xff] %v2131
                  %v2133 = vld [vmem:[%s2061 + $0x118] sm:$0xff]
                  %2134 = vst [vmem:[%s2062 + $0x118] sm:$0xff] %v2133
                  %v2135 = vld [vmem:[%s2061 + $0x120] sm:$0xff]
                  %2136 = vst [vmem:[%s2062 + $0x120] sm:$0xff] %v2135
                  %v2137 = vld [vmem:[%s2061 + $0x128] sm:$0xff]
                  %2138 = vst [vmem:[%s2062 + $0x128] sm:$0xff] %v2137
                  %v2139 = vld [vmem:[%s2061 + $0x130] sm:$0xff]
                  %2140 = vst [vmem:[%s2062 + $0x130] sm:$0xff] %v2139
                  %v2141 = vld [vmem:[%s2061 + $0x138] sm:$0xff]
                  %2142 = vst [vmem:[%s2062 + $0x138] sm:$0xff] %v2141
                  %v2143 = vld [vmem:[%s2061 + $0x140] sm:$0xff]
                  %2144 = vst [vmem:[%s2062 + $0x140] sm:$0xff] %v2143
                  %v2145 = vld [vmem:[%s2061 + $0x148] sm:$0xff]
                  %2146 = vst [vmem:[%s2062 + $0x148] sm:$0xff] %v2145
                  %v2147 = vld [vmem:[%s2061 + $0x150] sm:$0xff]
                  %2148 = vst [vmem:[%s2062 + $0x150] sm:$0xff] %v2147
                  %v2149 = vld [vmem:[%s2061 + $0x158] sm:$0xff]
                  %2150 = vst [vmem:[%s2062 + $0x158] sm:$0xff] %v2149
                  %v2151 = vld [vmem:[%s2061 + $0x160] sm:$0xff]
                  %2152 = vst [vmem:[%s2062 + $0x160] sm:$0xff] %v2151
                  %v2153 = vld [vmem:[%s2061 + $0x168] sm:$0xff]
                  %2154 = vst [vmem:[%s2062 + $0x168] sm:$0xff] %v2153
                  %v2155 = vld [vmem:[%s2061 + $0x170] sm:$0xff]
                  %2156 = vst [vmem:[%s2062 + $0x170] sm:$0xff] %v2155
                  %v2157 = vld [vmem:[%s2061 + $0x178] sm:$0xff]
                  %2158 = vst [vmem:[%s2062 + $0x178] sm:$0xff] %v2157
                  %v2159 = vld [vmem:[%s2061 + $0x180] sm:$0xff]
                  %2160 = vst [vmem:[%s2062 + $0x180] sm:$0xff] %v2159
                  %v2161 = vld [vmem:[%s2061 + $0x188] sm:$0xff]
                  %2162 = vst [vmem:[%s2062 + $0x188] sm:$0xff] %v2161
                  %v2163 = vld [vmem:[%s2061 + $0x190] sm:$0xff]
                  %2164 = vst [vmem:[%s2062 + $0x190] sm:$0xff] %v2163
                  %v2165 = vld [vmem:[%s2061 + $0x198] sm:$0xff]
                  %2166 = vst [vmem:[%s2062 + $0x198] sm:$0xff] %v2165
                  %v2167 = vld [vmem:[%s2061 + $0x1a0] sm:$0xff]
                  %2168 = vst [vmem:[%s2062 + $0x1a0] sm:$0xff] %v2167
                  %v2169 = vld [vmem:[%s2061 + $0x1a8] sm:$0xff]
                  %2170 = vst [vmem:[%s2062 + $0x1a8] sm:$0xff] %v2169
                  %v2171 = vld [vmem:[%s2061 + $0x1b0] sm:$0xff]
                  %2172 = vst [vmem:[%s2062 + $0x1b0] sm:$0xff] %v2171
                  %v2173 = vld [vmem:[%s2061 + $0x1b8] sm:$0xff]
                  %2174 = vst [vmem:[%s2062 + $0x1b8] sm:$0xff] %v2173
                  %v2175 = vld [vmem:[%s2061 + $0x1c0] sm:$0xff]
                  %2176 = vst [vmem:[%s2062 + $0x1c0] sm:$0xff] %v2175
                  %v2177 = vld [vmem:[%s2061 + $0x1c8] sm:$0xff]
                  %2178 = vst [vmem:[%s2062 + $0x1c8] sm:$0xff] %v2177
                  %v2179 = vld [vmem:[%s2061 + $0x1d0] sm:$0xff]
                  %2180 = vst [vmem:[%s2062 + $0x1d0] sm:$0xff] %v2179
                  %v2181 = vld [vmem:[%s2061 + $0x1d8] sm:$0xff]
                  %2182 = vst [vmem:[%s2062 + $0x1d8] sm:$0xff] %v2181
                  %v2183 = vld [vmem:[%s2061 + $0x1e0] sm:$0xff]
                  %2184 = vst [vmem:[%s2062 + $0x1e0] sm:$0xff] %v2183
                  %v2185 = vld [vmem:[%s2061 + $0x1e8] sm:$0xff]
                  %2186 = vst [vmem:[%s2062 + $0x1e8] sm:$0xff] %v2185
                  %v2187 = vld [vmem:[%s2061 + $0x1f0] sm:$0xff]
                  %2188 = vst [vmem:[%s2062 + $0x1f0] sm:$0xff] %v2187
                  %v2189 = vld [vmem:[%s2061 + $0x1f8] sm:$0xff]
                  %2190 = vst [vmem:[%s2062 + $0x1f8] sm:$0xff] %v2189
                  %s2191 = sadd.s32 1, %s2060
                  %p2192 = scmp.ge.s32.totalorder %s2191, %s2051
                  %s2193 = scalar_select %p2192, 0, %s2191
                  %s2194 = smul.u32 %s2193, 512
                  %s2195 = smul.u32 %s2193, 512
                  %s2196 = scalar_lea.vmem %s2011, %s2194 [#allocation4]
                  %s2197 = scalar_lea.vmem %s2022, %s2195
                $region128: #{edge_predictor_forward.1} parent=122 // loop_footer
                  %s2057 = sadd.s32 %s2055, 1
                $region129: #{edge_predictor_forward.1} parent=122 // loop_footer_branch
                  %2054 = sbr.rel target = $region125
                $region130: #{edge_predictor_forward.1} parent=122 // loop_exit
                  _
                %s2198 = sshrl.u32 %s2050, 6
                %s2199 = sand.u32 %s2050, 63
                %s2200 = smul.u32 %s2198, 64
                %s2201 = smul.u32 128, %s2200
                %s2202 = sshra.s32 %s2201, 4
                %s2203 = scalar_lea.vmem %s2011, %s2202 [#allocation4]
                %s2204 = smul.u32 128, %s2200
                %s2205 = sshra.s32 %s2204, 4
                %s2206 = scalar_lea.vmem %s2022, %s2205
                // While loop
                $region131: #{edge_predictor_forward.1} parent=122 // loop_pre_header
                  _
                $region132: #{edge_predictor_forward.1} parent=122 // loop_header
                  %s2210 = sphi 0, %s2212
                  %p2211 = scmp.ge.s32.totalorder %s2210, %s2199
                  %s2215 = sphi 0, %s2222
                  %s2216 = sphi %s2203, %s2225
                  %s2217 = sphi %s2206, %s2226
                $region133: #{edge_predictor_forward.1} parent=122 // loop_header_branch
                  %2214 = sbr.rel (%p2211) target = $region137
                $region134: #{edge_predictor_forward.1} parent=122 // loop_body
                  %v2218 = vld [vmem:[%s2216] sm:$0xff]
                  %2219 = vst [vmem:[%s2217] sm:$0xff] %v2218
                  %s2220 = sadd.s32 1, %s2215
                  %p2221 = scmp.ge.s32.totalorder %s2220, %s2199
                  %s2222 = scalar_select %p2221, 0, %s2220
                  %s2223 = smul.u32 %s2222, 8
                  %s2224 = smul.u32 %s2222, 8
                  %s2225 = scalar_lea.vmem %s2203, %s2223 [#allocation4]
                  %s2226 = scalar_lea.vmem %s2206, %s2224
                $region135: #{edge_predictor_forward.1} parent=122 // loop_footer
                  %s2212 = sadd.s32 %s2210, 1
                $region136: #{edge_predictor_forward.1} parent=122 // loop_footer_branch
                  %2209 = sbr.rel target = $region132
                $region137: #{edge_predictor_forward.1} parent=122 // loop_exit
                  _
              $region123: #{edge_predictor_forward.1} parent=107 // pred_fallthru
                _
              %p2227 = pneg %p2046
              // Predicated region
              $region138: #{edge_predictor_forward.1} parent=107 // pred_check
                _
              $region139: #{edge_predictor_forward.1} parent=107 // pred_check_branch
                %2229 = sbr.rel (%p2046) target = $region141
              $region140: #{edge_predictor_forward.1} parent=107 // pred_region
                %s2230 = sand.u32 %s2023, 7
                %s2231 = ssub.s32 %s2023, %s2230
                %s2232 = scalar_lea.vmem %s2011, %s2231 [#allocation4]
                %s2233 = ssub.s32 %s2023, %s2230
                %s2234 = scalar_lea.vmem %s2022, %s2233
                %s2235 = sshrl.u32 %s2023, 3
                %s2236 = sshrl.u32 %s2235, 6
                // While loop
                $region142: #{edge_predictor_forward.1} parent=140 // loop_pre_header
                  _
                $region143: #{edge_predictor_forward.1} parent=140 // loop_header
                  %s2240 = sphi 0, %s2242
                  %p2241 = scmp.ge.s32.totalorder %s2240, %s2236
                  %s2245 = sphi 0, %s2378
                  %s2246 = sphi %s2011, %s2381
                  %s2247 = sphi %s2022, %s2382
                $region144: #{edge_predictor_forward.1} parent=140 // loop_header_branch
                  %2244 = sbr.rel (%p2241) target = $region148
                $region145: #{edge_predictor_forward.1} parent=140 // loop_body
                  %v2248 = vld [vmem:[%s2246] sm:$0xff]
                  %2249 = vst [vmem:[%s2247] sm:$0xff] %v2248
                  %v2250 = vld [vmem:[%s2246 + $0x8] sm:$0xff]
                  %2251 = vst [vmem:[%s2247 + $0x8] sm:$0xff] %v2250
                  %v2252 = vld [vmem:[%s2246 + $0x10] sm:$0xff]
                  %2253 = vst [vmem:[%s2247 + $0x10] sm:$0xff] %v2252
                  %v2254 = vld [vmem:[%s2246 + $0x18] sm:$0xff]
                  %2255 = vst [vmem:[%s2247 + $0x18] sm:$0xff] %v2254
                  %v2256 = vld [vmem:[%s2246 + $0x20] sm:$0xff]
                  %2257 = vst [vmem:[%s2247 + $0x20] sm:$0xff] %v2256
                  %v2258 = vld [vmem:[%s2246 + $0x28] sm:$0xff]
                  %2259 = vst [vmem:[%s2247 + $0x28] sm:$0xff] %v2258
                  %v2260 = vld [vmem:[%s2246 + $0x30] sm:$0xff]
                  %2261 = vst [vmem:[%s2247 + $0x30] sm:$0xff] %v2260
                  %v2262 = vld [vmem:[%s2246 + $0x38] sm:$0xff]
                  %2263 = vst [vmem:[%s2247 + $0x38] sm:$0xff] %v2262
                  %v2264 = vld [vmem:[%s2246 + $0x40] sm:$0xff]
                  %2265 = vst [vmem:[%s2247 + $0x40] sm:$0xff] %v2264
                  %v2266 = vld [vmem:[%s2246 + $0x48] sm:$0xff]
                  %2267 = vst [vmem:[%s2247 + $0x48] sm:$0xff] %v2266
                  %v2268 = vld [vmem:[%s2246 + $0x50] sm:$0xff]
                  %2269 = vst [vmem:[%s2247 + $0x50] sm:$0xff] %v2268
                  %v2270 = vld [vmem:[%s2246 + $0x58] sm:$0xff]
                  %2271 = vst [vmem:[%s2247 + $0x58] sm:$0xff] %v2270
                  %v2272 = vld [vmem:[%s2246 + $0x60] sm:$0xff]
                  %2273 = vst [vmem:[%s2247 + $0x60] sm:$0xff] %v2272
                  %v2274 = vld [vmem:[%s2246 + $0x68] sm:$0xff]
                  %2275 = vst [vmem:[%s2247 + $0x68] sm:$0xff] %v2274
                  %v2276 = vld [vmem:[%s2246 + $0x70] sm:$0xff]
                  %2277 = vst [vmem:[%s2247 + $0x70] sm:$0xff] %v2276
                  %v2278 = vld [vmem:[%s2246 + $0x78] sm:$0xff]
                  %2279 = vst [vmem:[%s2247 + $0x78] sm:$0xff] %v2278
                  %v2280 = vld [vmem:[%s2246 + $0x80] sm:$0xff]
                  %2281 = vst [vmem:[%s2247 + $0x80] sm:$0xff] %v2280
                  %v2282 = vld [vmem:[%s2246 + $0x88] sm:$0xff]
                  %2283 = vst [vmem:[%s2247 + $0x88] sm:$0xff] %v2282
                  %v2284 = vld [vmem:[%s2246 + $0x90] sm:$0xff]
                  %2285 = vst [vmem:[%s2247 + $0x90] sm:$0xff] %v2284
                  %v2286 = vld [vmem:[%s2246 + $0x98] sm:$0xff]
                  %2287 = vst [vmem:[%s2247 + $0x98] sm:$0xff] %v2286
                  %v2288 = vld [vmem:[%s2246 + $0xa0] sm:$0xff]
                  %2289 = vst [vmem:[%s2247 + $0xa0] sm:$0xff] %v2288
                  %v2290 = vld [vmem:[%s2246 + $0xa8] sm:$0xff]
                  %2291 = vst [vmem:[%s2247 + $0xa8] sm:$0xff] %v2290
                  %v2292 = vld [vmem:[%s2246 + $0xb0] sm:$0xff]
                  %2293 = vst [vmem:[%s2247 + $0xb0] sm:$0xff] %v2292
                  %v2294 = vld [vmem:[%s2246 + $0xb8] sm:$0xff]
                  %2295 = vst [vmem:[%s2247 + $0xb8] sm:$0xff] %v2294
                  %v2296 = vld [vmem:[%s2246 + $0xc0] sm:$0xff]
                  %2297 = vst [vmem:[%s2247 + $0xc0] sm:$0xff] %v2296
                  %v2298 = vld [vmem:[%s2246 + $0xc8] sm:$0xff]
                  %2299 = vst [vmem:[%s2247 + $0xc8] sm:$0xff] %v2298
                  %v2300 = vld [vmem:[%s2246 + $0xd0] sm:$0xff]
                  %2301 = vst [vmem:[%s2247 + $0xd0] sm:$0xff] %v2300
                  %v2302 = vld [vmem:[%s2246 + $0xd8] sm:$0xff]
                  %2303 = vst [vmem:[%s2247 + $0xd8] sm:$0xff] %v2302
                  %v2304 = vld [vmem:[%s2246 + $0xe0] sm:$0xff]
                  %2305 = vst [vmem:[%s2247 + $0xe0] sm:$0xff] %v2304
                  %v2306 = vld [vmem:[%s2246 + $0xe8] sm:$0xff]
                  %2307 = vst [vmem:[%s2247 + $0xe8] sm:$0xff] %v2306
                  %v2308 = vld [vmem:[%s2246 + $0xf0] sm:$0xff]
                  %2309 = vst [vmem:[%s2247 + $0xf0] sm:$0xff] %v2308
                  %v2310 = vld [vmem:[%s2246 + $0xf8] sm:$0xff]
                  %2311 = vst [vmem:[%s2247 + $0xf8] sm:$0xff] %v2310
                  %v2312 = vld [vmem:[%s2246 + $0x100] sm:$0xff]
                  %2313 = vst [vmem:[%s2247 + $0x100] sm:$0xff] %v2312
                  %v2314 = vld [vmem:[%s2246 + $0x108] sm:$0xff]
                  %2315 = vst [vmem:[%s2247 + $0x108] sm:$0xff] %v2314
                  %v2316 = vld [vmem:[%s2246 + $0x110] sm:$0xff]
                  %2317 = vst [vmem:[%s2247 + $0x110] sm:$0xff] %v2316
                  %v2318 = vld [vmem:[%s2246 + $0x118] sm:$0xff]
                  %2319 = vst [vmem:[%s2247 + $0x118] sm:$0xff] %v2318
                  %v2320 = vld [vmem:[%s2246 + $0x120] sm:$0xff]
                  %2321 = vst [vmem:[%s2247 + $0x120] sm:$0xff] %v2320
                  %v2322 = vld [vmem:[%s2246 + $0x128] sm:$0xff]
                  %2323 = vst [vmem:[%s2247 + $0x128] sm:$0xff] %v2322
                  %v2324 = vld [vmem:[%s2246 + $0x130] sm:$0xff]
                  %2325 = vst [vmem:[%s2247 + $0x130] sm:$0xff] %v2324
                  %v2326 = vld [vmem:[%s2246 + $0x138] sm:$0xff]
                  %2327 = vst [vmem:[%s2247 + $0x138] sm:$0xff] %v2326
                  %v2328 = vld [vmem:[%s2246 + $0x140] sm:$0xff]
                  %2329 = vst [vmem:[%s2247 + $0x140] sm:$0xff] %v2328
                  %v2330 = vld [vmem:[%s2246 + $0x148] sm:$0xff]
                  %2331 = vst [vmem:[%s2247 + $0x148] sm:$0xff] %v2330
                  %v2332 = vld [vmem:[%s2246 + $0x150] sm:$0xff]
                  %2333 = vst [vmem:[%s2247 + $0x150] sm:$0xff] %v2332
                  %v2334 = vld [vmem:[%s2246 + $0x158] sm:$0xff]
                  %2335 = vst [vmem:[%s2247 + $0x158] sm:$0xff] %v2334
                  %v2336 = vld [vmem:[%s2246 + $0x160] sm:$0xff]
                  %2337 = vst [vmem:[%s2247 + $0x160] sm:$0xff] %v2336
                  %v2338 = vld [vmem:[%s2246 + $0x168] sm:$0xff]
                  %2339 = vst [vmem:[%s2247 + $0x168] sm:$0xff] %v2338
                  %v2340 = vld [vmem:[%s2246 + $0x170] sm:$0xff]
                  %2341 = vst [vmem:[%s2247 + $0x170] sm:$0xff] %v2340
                  %v2342 = vld [vmem:[%s2246 + $0x178] sm:$0xff]
                  %2343 = vst [vmem:[%s2247 + $0x178] sm:$0xff] %v2342
                  %v2344 = vld [vmem:[%s2246 + $0x180] sm:$0xff]
                  %2345 = vst [vmem:[%s2247 + $0x180] sm:$0xff] %v2344
                  %v2346 = vld [vmem:[%s2246 + $0x188] sm:$0xff]
                  %2347 = vst [vmem:[%s2247 + $0x188] sm:$0xff] %v2346
                  %v2348 = vld [vmem:[%s2246 + $0x190] sm:$0xff]
                  %2349 = vst [vmem:[%s2247 + $0x190] sm:$0xff] %v2348
                  %v2350 = vld [vmem:[%s2246 + $0x198] sm:$0xff]
                  %2351 = vst [vmem:[%s2247 + $0x198] sm:$0xff] %v2350
                  %v2352 = vld [vmem:[%s2246 + $0x1a0] sm:$0xff]
                  %2353 = vst [vmem:[%s2247 + $0x1a0] sm:$0xff] %v2352
                  %v2354 = vld [vmem:[%s2246 + $0x1a8] sm:$0xff]
                  %2355 = vst [vmem:[%s2247 + $0x1a8] sm:$0xff] %v2354
                  %v2356 = vld [vmem:[%s2246 + $0x1b0] sm:$0xff]
                  %2357 = vst [vmem:[%s2247 + $0x1b0] sm:$0xff] %v2356
                  %v2358 = vld [vmem:[%s2246 + $0x1b8] sm:$0xff]
                  %2359 = vst [vmem:[%s2247 + $0x1b8] sm:$0xff] %v2358
                  %v2360 = vld [vmem:[%s2246 + $0x1c0] sm:$0xff]
                  %2361 = vst [vmem:[%s2247 + $0x1c0] sm:$0xff] %v2360
                  %v2362 = vld [vmem:[%s2246 + $0x1c8] sm:$0xff]
                  %2363 = vst [vmem:[%s2247 + $0x1c8] sm:$0xff] %v2362
                  %v2364 = vld [vmem:[%s2246 + $0x1d0] sm:$0xff]
                  %2365 = vst [vmem:[%s2247 + $0x1d0] sm:$0xff] %v2364
                  %v2366 = vld [vmem:[%s2246 + $0x1d8] sm:$0xff]
                  %2367 = vst [vmem:[%s2247 + $0x1d8] sm:$0xff] %v2366
                  %v2368 = vld [vmem:[%s2246 + $0x1e0] sm:$0xff]
                  %2369 = vst [vmem:[%s2247 + $0x1e0] sm:$0xff] %v2368
                  %v2370 = vld [vmem:[%s2246 + $0x1e8] sm:$0xff]
                  %2371 = vst [vmem:[%s2247 + $0x1e8] sm:$0xff] %v2370
                  %v2372 = vld [vmem:[%s2246 + $0x1f0] sm:$0xff]
                  %2373 = vst [vmem:[%s2247 + $0x1f0] sm:$0xff] %v2372
                  %v2374 = vld [vmem:[%s2246 + $0x1f8] sm:$0xff]
                  %2375 = vst [vmem:[%s2247 + $0x1f8] sm:$0xff] %v2374
                  %s2376 = sadd.s32 1, %s2245
                  %p2377 = scmp.ge.s32.totalorder %s2376, %s2236
                  %s2378 = scalar_select %p2377, 0, %s2376
                  %s2379 = smul.u32 %s2378, 512
                  %s2380 = smul.u32 %s2378, 512
                  %s2381 = scalar_lea.vmem %s2011, %s2379 [#allocation4]
                  %s2382 = scalar_lea.vmem %s2022, %s2380
                $region146: #{edge_predictor_forward.1} parent=140 // loop_footer
                  %s2242 = sadd.s32 %s2240, 1
                $region147: #{edge_predictor_forward.1} parent=140 // loop_footer_branch
                  %2239 = sbr.rel target = $region143
                $region148: #{edge_predictor_forward.1} parent=140 // loop_exit
                  _
                %s2383 = sshrl.u32 %s2235, 6
                %s2384 = sand.u32 %s2235, 63
                %s2385 = smul.u32 %s2383, 64
                %s2386 = smul.u32 128, %s2385
                %s2387 = sshra.s32 %s2386, 4
                %s2388 = scalar_lea.vmem %s2011, %s2387 [#allocation4]
                %s2389 = smul.u32 128, %s2385
                %s2390 = sshra.s32 %s2389, 4
                %s2391 = scalar_lea.vmem %s2022, %s2390
                // While loop
                $region149: #{edge_predictor_forward.1} parent=140 // loop_pre_header
                  _
                $region150: #{edge_predictor_forward.1} parent=140 // loop_header
                  %s2395 = sphi 0, %s2397
                  %p2396 = scmp.ge.s32.totalorder %s2395, %s2384
                  %s2400 = sphi 0, %s2407
                  %s2401 = sphi %s2388, %s2410
                  %s2402 = sphi %s2391, %s2411
                $region151: #{edge_predictor_forward.1} parent=140 // loop_header_branch
                  %2399 = sbr.rel (%p2396) target = $region155
                $region152: #{edge_predictor_forward.1} parent=140 // loop_body
                  %v2403 = vld [vmem:[%s2401] sm:$0xff]
                  %2404 = vst [vmem:[%s2402] sm:$0xff] %v2403
                  %s2405 = sadd.s32 1, %s2400
                  %p2406 = scmp.ge.s32.totalorder %s2405, %s2384
                  %s2407 = scalar_select %p2406, 0, %s2405
                  %s2408 = smul.u32 %s2407, 8
                  %s2409 = smul.u32 %s2407, 8
                  %s2410 = scalar_lea.vmem %s2388, %s2408 [#allocation4]
                  %s2411 = scalar_lea.vmem %s2391, %s2409
                $region153: #{edge_predictor_forward.1} parent=140 // loop_footer
                  %s2397 = sadd.s32 %s2395, 1
                $region154: #{edge_predictor_forward.1} parent=140 // loop_footer_branch
                  %2394 = sbr.rel target = $region150
                $region155: #{edge_predictor_forward.1} parent=140 // loop_exit
                  _
                %s2412 = sshllo.u32 0, %s2230
                loop: start=0, step=1, limit=1
                $region156: #{edge_predictor_forward.1} parent=140 // loop_pre_header
                  _
                $region157: #{edge_predictor_forward.1} parent=140 // loop_header
                  %s2414 = sphi 0, %s2418
                  %p2415 = scmp.ge.s32.totalorder %s2414, 1
                  %s2419 = sphi %s2232, %s2232
                  %s2420 = sphi %s2234, %s2234
                $region158: #{edge_predictor_forward.1} parent=140 // loop_header_branch
                  %2417 = sbr.rel (%p2415) target = $region162
                $region159: #{edge_predictor_forward.1} parent=140 // loop_body
                  %v2421 = vld [vmem:[%s2419] sm:%s2412]
                  %2422 = vst [vmem:[%s2420] sm:%s2412] %v2421
                $region160: #{edge_predictor_forward.1} parent=140 // loop_footer
                  %s2418 = sadd.s32 1, %s2414
                $region161: #{edge_predictor_forward.1} parent=140 // loop_footer_branch
                  %2413 = sbr.rel target = $region157
                $region162: #{edge_predictor_forward.1} parent=140 // loop_exit
                  _
              $region141: #{edge_predictor_forward.1} parent=107 // pred_fallthru
                _
            $region108: #{edge_predictor_forward.1} parent=103 // pred_fallthru
              _
            // Predicated region
            $region109: #{edge_predictor_forward.1} parent=103 // pred_check
              %p2031 = pneg %p2027
            $region110: #{edge_predictor_forward.1} parent=103 // pred_check_branch
              %2033 = sbr.rel (%p2031) target = $region112
            $region111: #{edge_predictor_forward.1} parent=103 // pred_region
              %s2034 = sshllo.u32 0, %s2023
              loop: start=0, step=1, limit=1
              $region113: #{edge_predictor_forward.1} parent=111 // loop_pre_header
                _
              $region114: #{edge_predictor_forward.1} parent=111 // loop_header
                %s2036 = sphi 0, %s2040
                %p2037 = scmp.ge.s32.totalorder %s2036, 1
                %s2041 = sphi %s2011, %s2011
                %s2042 = sphi %s2022, %s2022
              $region115: #{edge_predictor_forward.1} parent=111 // loop_header_branch
                %2039 = sbr.rel (%p2037) target = $region119
              $region116: #{edge_predictor_forward.1} parent=111 // loop_body
                %v2043 = vld [vmem:[%s2041] sm:%s2034]
                %2044 = vst [vmem:[%s2042] sm:%s2034] %v2043
              $region117: #{edge_predictor_forward.1} parent=111 // loop_footer
                %s2040 = sadd.s32 1, %s2036
              $region118: #{edge_predictor_forward.1} parent=111 // loop_footer_branch
                %2035 = sbr.rel target = $region114
              $region119: #{edge_predictor_forward.1} parent=111 // loop_exit
                _
            $region112: #{edge_predictor_forward.1} parent=103 // pred_fallthru
              _
          $region104: #{edge_predictor_forward.1} parent=99 // pred_fallthru
            _
          %2423 = vnop
        $region100: #{edge_predictor_forward.1} parent=91 // pred_fallthru
          _
      $region92: #{edge_predictor_forward.1} parent=5 // pred_fallthru
        _
      %p2424 = scmp.le.s32.totalorder 2, %s14
      // Predicated region
      $region163: #{edge_predictor_forward.1} parent=5 // pred_check
        %p2425 = pneg %p2424
      $region164: #{edge_predictor_forward.1} parent=5 // pred_check_branch
        %2427 = sbr.rel (%p2425) target = $region166
      $region165: #{edge_predictor_forward.1} parent=5 // pred_region
        %s2428 = ssub.s32 %s14, 2
        // Predicated region
        $region167: #{edge_predictor_forward.1} parent=165 // pred_check
          %p2429 = pneg %p174
        $region168: #{edge_predictor_forward.1} parent=165 // pred_check_branch
          %2431 = sbr.rel (%p2429) target = $region170
        $region169: #{edge_predictor_forward.1} parent=165 // pred_region
          %s2432 = sand.u32 %s159, 1
          %s2433 = sand.u32 %s159, 1
          %s2434 = smul.addr %s2433, 8
          %s2435 = scalar_lea.vmem [#allocation4], %s2434
        $region170: #{edge_predictor_forward.1} parent=165 // pred_fallthru
          _
      $region166: #{edge_predictor_forward.1} parent=5 // pred_fallthru
        _
    $region6: #{edge_predictor_forward.1} parent=1 // loop_footer
      %s18 = sadd.s32 1, %s14
    $region7: #{edge_predictor_forward.1} parent=1 // loop_footer_branch
      %13 = sbr.rel target = $region3
    $region8: #{edge_predictor_forward.1} parent=1 // loop_exit
      _

</llo_original>
